<compile_context>
chip_gen: v5e
topology: v5e:2x2
jax: 0.10.0
libtpu: 0.0.40
codegen_flags: <defaults>
</compile_context>

<pallas_src>
import functools

import jax
import jax.numpy as jnp
from jax import lax
from jax.experimental import pallas as pl
from jax.experimental.pallas import tpu as pltpu


def _shift_rows(x, dh):
    """y[h, w, c] = x[h + dh, w, c], zero where h + dh is out of range.

    Axis 0 is the majormost dim of the (H, W, C) tile -> cheap concat."""
    if dh == 0:
        return x
    H = x.shape[0]
    zero = jnp.zeros((1,) + x.shape[1:], x.dtype)
    if dh > 0:                                              # dh == +1
        return jnp.concatenate([x[1:], zero], axis=0)
    return jnp.concatenate([zero, x[:H - 1]], axis=0)       # dh == -1


def _shift_cols(x, dw):
    """y[h, w, c] = x[h, w + dw, c], zero where w + dw is out of range."""
    if dw == 0:
        return x
    W = x.shape[1]
    zero = jnp.zeros((x.shape[0], 1, x.shape[2]), x.dtype)
    if dw > 0:                                              # dw == +1
        return jnp.concatenate([x[:, 1:], zero], axis=1)
    return jnp.concatenate([zero, x[:, :W - 1]], axis=1)    # dw == -1


def _im2col_3x3(x, compute_dtype):
    """(H, W, C) -> (H*W, 9*C) tap matrix for a 3x3 'same' (zero padded) conv.

    Tap order along K is (kw, kh, c) with kw outermost — it must match the
    weight flattening in the wrapper. Shifting columns first means only 3
    sublane shifts per conv; the 9 row shifts are majormost-dim ops."""
    H, W, C = x.shape
    taps = []
    for dw in (-1, 0, 1):
        xw = _shift_cols(x, dw)
        for dh in (-1, 0, 1):
            taps.append(_shift_rows(xw, dh))
    t = jnp.concatenate(taps, axis=-1)                      # (H, W, 9*C)
    return t.reshape(H * W, 9 * C).astype(compute_dtype)


def _wide_res_block_kernel(x_ref, w1_ref, b1_ref, w2_ref, b2_ref, o_ref, *,
                           compute_dtype):
    # x_ref: (1, H, W, Cin) f32     w1_ref: (9*Cin, Cw)   b1_ref: (1, Cw)  f32
    # o_ref: (1, H, W, Cin) f32     w2_ref: (9*Cw, Cin)   b2_ref: (1, Cin) f32
    _, H, W, Cin = x_ref.shape
    Cw = w1_ref.shape[-1]

    x = x_ref[0]                                            # (H, W, Cin) f32

    # ---- conv1: single big-K matmul over the 9-tap im2col matrix, + ReLU ----
    t1 = _im2col_3x3(x, compute_dtype)                      # (H*W, 9*Cin)
    acc1 = jnp.dot(t1, w1_ref[...], preferred_element_type=jnp.float32)
    h = jnp.maximum(acc1 + b1_ref[...], 0.0)                # (H*W, Cw) f32

    # ---- conv2 + bias + residual + ReLU (f32 epilogue) ----
    t2 = _im2col_3x3(h.reshape(H, W, Cw), compute_dtype)    # (H*W, 9*Cw)
    acc2 = jnp.dot(t2, w2_ref[...], preferred_element_type=jnp.float32)
    out = jnp.maximum(acc2 + b2_ref[...] + x.reshape(H * W, Cin), 0.0)

    o_ref[...] = out.reshape(1, H, W, Cin).astype(o_ref.dtype)


def wide_residual_block(x_nchw, w1_oihw, b1, w2_oihw, b2, *,
                        compute_dtype=jnp.bfloat16):
    """PyTorch-convention inputs: x (N,C,H,W); weights (Cout,Cin,3,3); bias (Cout,).

    Matmuls run in `compute_dtype` (bf16 by default, f32 accumulation);
    bias / residual / ReLU epilogue is f32."""
    x = jnp.transpose(x_nchw, (0, 2, 3, 1)).astype(jnp.float32)       # NHWC
    N, H, W, Cin = x.shape
    Cw = w1_oihw.shape[0]

    # OIHW -> (kw, kh, ci, co) -> flatten the 3x3 taps into K: (9*Cin, Cout).
    # Row order (kw, kh, ci) matches _im2col_3x3's tap order.
    w1f = jnp.transpose(w1_oihw, (3, 2, 1, 0)).reshape(9 * Cin, Cw)
    w2f = jnp.transpose(w2_oihw, (3, 2, 1, 0)).reshape(9 * Cw, Cin)
    w1f = w1f.astype(compute_dtype)
    w2f = w2f.astype(compute_dtype)

    kernel = functools.partial(_wide_res_block_kernel,
                               compute_dtype=compute_dtype)

    grid_spec = pltpu.PrefetchScalarGridSpec(
        num_scalar_prefetch=0,
        grid=(N,),                                  # one image per grid step
        in_specs=[
            pl.BlockSpec((1, H, W, Cin), lambda n: (n, 0, 0, 0)),
            pl.BlockSpec((9 * Cin, Cw), lambda n: (0, 0)),   # resident weights
            pl.BlockSpec((1, Cw), lambda n: (0, 0)),
            pl.BlockSpec((9 * Cw, Cin), lambda n: (0, 0)),
            pl.BlockSpec((1, Cin), lambda n: (0, 0)),
        ],
        out_specs=pl.BlockSpec((1, H, W, Cin), lambda n: (n, 0, 0, 0)),
    )

    out_nhwc = pl.pallas_call(
        kernel,
        out_shape=jax.ShapeDtypeStruct((N, H, W, Cin), jnp.float32),
        grid_spec=grid_spec,
        compiler_params=pltpu.CompilerParams(
            dimension_semantics=("parallel",),   # batch shards across TCs (v7x)
            vmem_limit_bytes=32 * 1024 * 1024,   # safe on v5e/v6e/v7x
        ),
    )(x, w1f, b1.reshape(1, Cw).astype(jnp.float32),
      w2f, b2.reshape(1, Cin).astype(jnp.float32))

    return jnp.transpose(out_nhwc, (0, 3, 1, 2))             # back to NCHW


def _reference(x_nchw, w1_oihw, b1, w2_oihw, b2, compute_dtype=jnp.bfloat16):
    """Plain-JAX reference (NHWC conv) using the same matmul dtype as the kernel."""
    x = jnp.transpose(x_nchw, (0, 2, 3, 1)).astype(jnp.float32)
    w1 = jnp.transpose(w1_oihw, (2, 3, 1, 0)).astype(compute_dtype)   # HWIO
    w2 = jnp.transpose(w2_oihw, (2, 3, 1, 0)).astype(compute_dtype)
    dn = ('NHWC', 'HWIO', 'NHWC')
    h = lax.conv_general_dilated(x.astype(compute_dtype), w1, (1, 1), 'SAME',
                                 dimension_numbers=dn,
                                 preferred_element_type=jnp.float32)
    h = jnp.maximum(h + b1[None, None, None, :], 0.0)
    o = lax.conv_general_dilated(h.astype(compute_dtype), w2, (1, 1), 'SAME',
                                 dimension_numbers=dn,
                                 preferred_element_type=jnp.float32)
    o = jnp.maximum(o + b2[None, None, None, :] + x, 0.0)
    return jnp.transpose(o, (0, 3, 1, 2))


if __name__ == "__main__":
    # Small shapes consistent with the module: batch=2, in_channels=4,
    # spatial=16x16, widen_factor=2 -> widened_channels=8.
    N, Cin, H, W = 2, 4, 16, 16
    widen_factor = 2
    Cw = Cin * widen_factor

    key = jax.random.PRNGKey(0)
    kx, k1, kb1, k2, kb2 = jax.random.split(key, 5)

    x = jax.random.normal(kx, (N, Cin, H, W), jnp.float32)
    # Deterministic parameter init (fan-in scaled uniform, like PyTorch defaults).
    fan1 = Cin * 3 * 3
    w1 = jax.random.uniform(k1, (Cw, Cin, 3, 3), jnp.float32,
                            -1.0 / jnp.sqrt(fan1), 1.0 / jnp.sqrt(fan1))
    b1 = jax.random.uniform(kb1, (Cw,), jnp.float32,
                            -1.0 / jnp.sqrt(fan1), 1.0 / jnp.sqrt(fan1))
    fan2 = Cw * 3 * 3
    w2 = jax.random.uniform(k2, (Cin, Cw, 3, 3), jnp.float32,
                            -1.0 / jnp.sqrt(fan2), 1.0 / jnp.sqrt(fan2))
    b2 = jax.random.uniform(kb2, (Cin,), jnp.float32,
                            -1.0 / jnp.sqrt(fan2), 1.0 / jnp.sqrt(fan2))

    out = jax.block_until_ready(wide_residual_block(x, w1, b1, w2, b2))
    ref = jax.block_until_ready(_reference(x, w1, b1, w2, b2))

    assert out.shape == (N, Cin, H, W)
    max_err = float(jnp.max(jnp.abs(out - ref)))
    assert jnp.allclose(out, ref, atol=2e-3, rtol=2e-3), \
        f"mismatch vs reference (max abs err {max_err})"

    print("KERNEL_OK")
</pallas_src>

<mosaic_0001>
module attributes {stable_mosaic.version = 11 : i64} {
  func.func @_wide_res_block_kernel(%arg0: i32, %arg1: memref<1x16x16x4xf32, #tpu.memory_space<vmem>>, %arg2: memref<36x8xbf16, #tpu.memory_space<vmem>>, %arg3: memref<1x8xf32, #tpu.memory_space<vmem>>, %arg4: memref<72x4xbf16, #tpu.memory_space<vmem>>, %arg5: memref<1x4xf32, #tpu.memory_space<vmem>>, %arg6: memref<1x16x16x4xf32, #tpu.memory_space<vmem>>) attributes {dimension_semantics = [#tpu.dimension_semantics<parallel>], iteration_bounds = array<i64: 2>, scalar_prefetch = 0 : i64, scratch_operands = 0 : i64, tpu.core_type = #tpu.core_type<tc>, window_params = [{transform_indices = @transform_0, window_bounds = array<i64: 1, 16, 16, 4>}, {pipeline_mode = #tpu.pipeline_mode<synchronous>, transform_indices = @transform_1, window_bounds = array<i64: 36, 8>}, {pipeline_mode = #tpu.pipeline_mode<synchronous>, transform_indices = @transform_2, window_bounds = array<i64: 1, 8>}, {pipeline_mode = #tpu.pipeline_mode<synchronous>, transform_indices = @transform_3, window_bounds = array<i64: 72, 4>}, {pipeline_mode = #tpu.pipeline_mode<synchronous>, transform_indices = @transform_4, window_bounds = array<i64: 1, 4>}, {transform_indices = @transform_5, window_bounds = array<i64: 1, 16, 16, 4>}]} {
    %c0 = arith.constant 0 : index
    %c0_0 = arith.constant 0 : index
    %c0_1 = arith.constant 0 : index
    %c0_2 = arith.constant 0 : index
    %0 = vector.load %arg1[%c0, %c0_0, %c0_1, %c0_2] : memref<1x16x16x4xf32, #tpu.memory_space<vmem>>, vector<1x16x16x4xf32>
    %1 = vector.shape_cast %0 : vector<1x16x16x4xf32> to vector<16x16x4xf32>
    %cst = arith.constant 0.000000e+00 : f32
    %2 = vector.broadcast %cst : f32 to vector<16x1x4xf32>
    %3 = vector.extract_strided_slice %1 {offsets = [0, 0, 0], sizes = [16, 15, 4], strides = [1, 1, 1]} : vector<16x16x4xf32> to vector<16x15x4xf32>
    %4 = tpu.concatenate %2, %3 in 1 : vector<16x1x4xf32>, vector<16x15x4xf32> -> vector<16x16x4xf32>
    %cst_3 = arith.constant 0.000000e+00 : f32
    %5 = vector.broadcast %cst_3 : f32 to vector<1x16x4xf32>
    %6 = vector.extract_strided_slice %4 {offsets = [0, 0, 0], sizes = [15, 16, 4], strides = [1, 1, 1]} : vector<16x16x4xf32> to vector<15x16x4xf32>
    %7 = tpu.concatenate %5, %6 in 0 : vector<1x16x4xf32>, vector<15x16x4xf32> -> vector<16x16x4xf32>
    %cst_4 = arith.constant 0.000000e+00 : f32
    %8 = vector.broadcast %cst_4 : f32 to vector<1x16x4xf32>
    %9 = vector.extract_strided_slice %4 {offsets = [1, 0, 0], sizes = [15, 16, 4], strides = [1, 1, 1]} : vector<16x16x4xf32> to vector<15x16x4xf32>
    %10 = tpu.concatenate %9, %8 in 0 : vector<15x16x4xf32>, vector<1x16x4xf32> -> vector<16x16x4xf32>
    %cst_5 = arith.constant 0.000000e+00 : f32
    %11 = vector.broadcast %cst_5 : f32 to vector<1x16x4xf32>
    %12 = vector.extract_strided_slice %1 {offsets = [0, 0, 0], sizes = [15, 16, 4], strides = [1, 1, 1]} : vector<16x16x4xf32> to vector<15x16x4xf32>
    %13 = tpu.concatenate %11, %12 in 0 : vector<1x16x4xf32>, vector<15x16x4xf32> -> vector<16x16x4xf32>
    %cst_6 = arith.constant 0.000000e+00 : f32
    %14 = vector.broadcast %cst_6 : f32 to vector<1x16x4xf32>
    %15 = vector.extract_strided_slice %1 {offsets = [1, 0, 0], sizes = [15, 16, 4], strides = [1, 1, 1]} : vector<16x16x4xf32> to vector<15x16x4xf32>
    %16 = tpu.concatenate %15, %14 in 0 : vector<15x16x4xf32>, vector<1x16x4xf32> -> vector<16x16x4xf32>
    %cst_7 = arith.constant 0.000000e+00 : f32
    %17 = vector.broadcast %cst_7 : f32 to vector<16x1x4xf32>
    %18 = vector.extract_strided_slice %1 {offsets = [0, 1, 0], sizes = [16, 15, 4], strides = [1, 1, 1]} : vector<16x16x4xf32> to vector<16x15x4xf32>
    %19 = tpu.concatenate %18, %17 in 1 : vector<16x15x4xf32>, vector<16x1x4xf32> -> vector<16x16x4xf32>
    %cst_8 = arith.constant 0.000000e+00 : f32
    %20 = vector.broadcast %cst_8 : f32 to vector<1x16x4xf32>
    %21 = vector.extract_strided_slice %19 {offsets = [0, 0, 0], sizes = [15, 16, 4], strides = [1, 1, 1]} : vector<16x16x4xf32> to vector<15x16x4xf32>
    %22 = tpu.concatenate %20, %21 in 0 : vector<1x16x4xf32>, vector<15x16x4xf32> -> vector<16x16x4xf32>
    %cst_9 = arith.constant 0.000000e+00 : f32
    %23 = vector.broadcast %cst_9 : f32 to vector<1x16x4xf32>
    %24 = vector.extract_strided_slice %19 {offsets = [1, 0, 0], sizes = [15, 16, 4], strides = [1, 1, 1]} : vector<16x16x4xf32> to vector<15x16x4xf32>
    %25 = tpu.concatenate %24, %23 in 0 : vector<15x16x4xf32>, vector<1x16x4xf32> -> vector<16x16x4xf32>
    %26 = tpu.concatenate %7, %4, %10, %13, %1, %16, %22, %19, %25 in 2 : vector<16x16x4xf32>, vector<16x16x4xf32>, vector<16x16x4xf32>, vector<16x16x4xf32>, vector<16x16x4xf32>, vector<16x16x4xf32>, vector<16x16x4xf32>, vector<16x16x4xf32>, vector<16x16x4xf32> -> vector<16x16x36xf32>
    %27 = vector.shape_cast %26 : vector<16x16x36xf32> to vector<256x36xf32>
    %28 = arith.truncf %27 : vector<256x36xf32> to vector<256x36xbf16>
    %c0_10 = arith.constant 0 : index
    %c0_11 = arith.constant 0 : index
    %29 = vector.load %arg2[%c0_10, %c0_11] : memref<36x8xbf16, #tpu.memory_space<vmem>>, vector<36x8xbf16>
    %cst_12 = arith.constant dense<0.000000e+00> : vector<256x8xf32>
    %30 = tpu.matmul %28, %29, %cst_12 {dimension_numbers = #tpu.dot_dimension_numbers<[1], [0], [0], [1], [0, 0, 1, 1], [], []>} : vector<256x36xbf16>, vector<36x8xbf16>, vector<256x8xf32> -> vector<256x8xf32>
    %c0_13 = arith.constant 0 : index
    %c0_14 = arith.constant 0 : index
    %31 = vector.load %arg3[%c0_13, %c0_14] : memref<1x8xf32, #tpu.memory_space<vmem>>, vector<1x8xf32>
    %32 = vector.broadcast %31 : vector<1x8xf32> to vector<256x8xf32>
    %33 = arith.addf %30, %32 : vector<256x8xf32>
    %cst_15 = arith.constant 0.000000e+00 : f32
    %34 = vector.broadcast %cst_15 : f32 to vector<256x8xf32>
    %35 = arith.maximumf %33, %34 : vector<256x8xf32>
    %36 = vector.shape_cast %35 : vector<256x8xf32> to vector<16x16x8xf32>
    %cst_16 = arith.constant 0.000000e+00 : f32
    %37 = vector.broadcast %cst_16 : f32 to vector<16x1x8xf32>
    %38 = vector.extract_strided_slice %36 {offsets = [0, 0, 0], sizes = [16, 15, 8], strides = [1, 1, 1]} : vector<16x16x8xf32> to vector<16x15x8xf32>
    %39 = tpu.concatenate %37, %38 in 1 : vector<16x1x8xf32>, vector<16x15x8xf32> -> vector<16x16x8xf32>
    %cst_17 = arith.constant 0.000000e+00 : f32
    %40 = vector.broadcast %cst_17 : f32 to vector<1x16x8xf32>
    %41 = vector.extract_strided_slice %39 {offsets = [0, 0, 0], sizes = [15, 16, 8], strides = [1, 1, 1]} : vector<16x16x8xf32> to vector<15x16x8xf32>
    %42 = tpu.concatenate %40, %41 in 0 : vector<1x16x8xf32>, vector<15x16x8xf32> -> vector<16x16x8xf32>
    %cst_18 = arith.constant 0.000000e+00 : f32
    %43 = vector.broadcast %cst_18 : f32 to vector<1x16x8xf32>
    %44 = vector.extract_strided_slice %39 {offsets = [1, 0, 0], sizes = [15, 16, 8], strides = [1, 1, 1]} : vector<16x16x8xf32> to vector<15x16x8xf32>
    %45 = tpu.concatenate %44, %43 in 0 : vector<15x16x8xf32>, vector<1x16x8xf32> -> vector<16x16x8xf32>
    %cst_19 = arith.constant 0.000000e+00 : f32
    %46 = vector.broadcast %cst_19 : f32 to vector<1x16x8xf32>
    %47 = vector.extract_strided_slice %36 {offsets = [0, 0, 0], sizes = [15, 16, 8], strides = [1, 1, 1]} : vector<16x16x8xf32> to vector<15x16x8xf32>
    %48 = tpu.concatenate %46, %47 in 0 : vector<1x16x8xf32>, vector<15x16x8xf32> -> vector<16x16x8xf32>
    %cst_20 = arith.constant 0.000000e+00 : f32
    %49 = vector.broadcast %cst_20 : f32 to vector<1x16x8xf32>
    %50 = vector.extract_strided_slice %36 {offsets = [1, 0, 0], sizes = [15, 16, 8], strides = [1, 1, 1]} : vector<16x16x8xf32> to vector<15x16x8xf32>
    %51 = tpu.concatenate %50, %49 in 0 : vector<15x16x8xf32>, vector<1x16x8xf32> -> vector<16x16x8xf32>
    %cst_21 = arith.constant 0.000000e+00 : f32
    %52 = vector.broadcast %cst_21 : f32 to vector<16x1x8xf32>
    %53 = vector.extract_strided_slice %36 {offsets = [0, 1, 0], sizes = [16, 15, 8], strides = [1, 1, 1]} : vector<16x16x8xf32> to vector<16x15x8xf32>
    %54 = tpu.concatenate %53, %52 in 1 : vector<16x15x8xf32>, vector<16x1x8xf32> -> vector<16x16x8xf32>
    %cst_22 = arith.constant 0.000000e+00 : f32
    %55 = vector.broadcast %cst_22 : f32 to vector<1x16x8xf32>
    %56 = vector.extract_strided_slice %54 {offsets = [0, 0, 0], sizes = [15, 16, 8], strides = [1, 1, 1]} : vector<16x16x8xf32> to vector<15x16x8xf32>
    %57 = tpu.concatenate %55, %56 in 0 : vector<1x16x8xf32>, vector<15x16x8xf32> -> vector<16x16x8xf32>
    %cst_23 = arith.constant 0.000000e+00 : f32
    %58 = vector.broadcast %cst_23 : f32 to vector<1x16x8xf32>
    %59 = vector.extract_strided_slice %54 {offsets = [1, 0, 0], sizes = [15, 16, 8], strides = [1, 1, 1]} : vector<16x16x8xf32> to vector<15x16x8xf32>
    %60 = tpu.concatenate %59, %58 in 0 : vector<15x16x8xf32>, vector<1x16x8xf32> -> vector<16x16x8xf32>
    %61 = tpu.concatenate %42, %39, %45, %48, %36, %51, %57, %54, %60 in 2 : vector<16x16x8xf32>, vector<16x16x8xf32>, vector<16x16x8xf32>, vector<16x16x8xf32>, vector<16x16x8xf32>, vector<16x16x8xf32>, vector<16x16x8xf32>, vector<16x16x8xf32>, vector<16x16x8xf32> -> vector<16x16x72xf32>
    %62 = vector.shape_cast %61 : vector<16x16x72xf32> to vector<256x72xf32>
    %63 = arith.truncf %62 : vector<256x72xf32> to vector<256x72xbf16>
    %c0_24 = arith.constant 0 : index
    %c0_25 = arith.constant 0 : index
    %64 = vector.load %arg4[%c0_24, %c0_25] : memref<72x4xbf16, #tpu.memory_space<vmem>>, vector<72x4xbf16>
    %cst_26 = arith.constant dense<0.000000e+00> : vector<256x4xf32>
    %65 = tpu.matmul %63, %64, %cst_26 {dimension_numbers = #tpu.dot_dimension_numbers<[1], [0], [0], [1], [0, 0, 1, 1], [], []>} : vector<256x72xbf16>, vector<72x4xbf16>, vector<256x4xf32> -> vector<256x4xf32>
    %c0_27 = arith.constant 0 : index
    %c0_28 = arith.constant 0 : index
    %66 = vector.load %arg5[%c0_27, %c0_28] : memref<1x4xf32, #tpu.memory_space<vmem>>, vector<1x4xf32>
    %67 = vector.broadcast %66 : vector<1x4xf32> to vector<256x4xf32>
    %68 = arith.addf %65, %67 : vector<256x4xf32>
    %69 = vector.shape_cast %1 : vector<16x16x4xf32> to vector<256x4xf32>
    %70 = arith.addf %68, %69 : vector<256x4xf32>
    %cst_29 = arith.constant 0.000000e+00 : f32
    %71 = vector.broadcast %cst_29 : f32 to vector<256x4xf32>
    %72 = arith.maximumf %70, %71 : vector<256x4xf32>
    %73 = vector.shape_cast %72 : vector<256x4xf32> to vector<1x16x16x4xf32>
    %c0_30 = arith.constant 0 : index
    %c0_31 = arith.constant 0 : index
    %c0_32 = arith.constant 0 : index
    %c0_33 = arith.constant 0 : index
    %74 = vector.load %arg6[%c0_30, %c0_31, %c0_32, %c0_33] : memref<1x16x16x4xf32, #tpu.memory_space<vmem>>, vector<1x16x16x4xf32>
    tpu.vector_store %arg6[%c0_30, %c0_31, %c0_32, %c0_33], %73 {strides = array<i32>} : memref<1x16x16x4xf32, #tpu.memory_space<vmem>>, vector<1x16x16x4xf32>,
    return
  }
  func.func @transform_0(%arg0: i32) -> (i32, i32, i32, i32) {
    %c0_i32 = arith.constant 0 : i32
    %c0_i32_0 = arith.constant 0 : i32
    %c0_i32_1 = arith.constant 0 : i32
    %c0_i32_2 = arith.constant 0 : i32
    return %arg0, %c0_i32, %c0_i32_0, %c0_i32_1 : i32, i32, i32, i32
  }
  func.func @transform_1(%arg0: i32) -> (i32, i32) {
    %c0_i32 = arith.constant 0 : i32
    %c0_i32_0 = arith.constant 0 : i32
    %c0_i32_1 = arith.constant 0 : i32
    return %c0_i32, %c0_i32_0 : i32, i32
  }
  func.func @transform_2(%arg0: i32) -> (i32, i32) {
    %c0_i32 = arith.constant 0 : i32
    %c0_i32_0 = arith.constant 0 : i32
    %c0_i32_1 = arith.constant 0 : i32
    return %c0_i32, %c0_i32_0 : i32, i32
  }
  func.func @transform_3(%arg0: i32) -> (i32, i32) {
    %c0_i32 = arith.constant 0 : i32
    %c0_i32_0 = arith.constant 0 : i32
    %c0_i32_1 = arith.constant 0 : i32
    return %c0_i32, %c0_i32_0 : i32, i32
  }
  func.func @transform_4(%arg0: i32) -> (i32, i32) {
    %c0_i32 = arith.constant 0 : i32
    %c0_i32_0 = arith.constant 0 : i32
    %c0_i32_1 = arith.constant 0 : i32
    return %c0_i32, %c0_i32_0 : i32, i32
  }
  func.func @transform_5(%arg0: i32) -> (i32, i32, i32, i32) {
    %c0_i32 = arith.constant 0 : i32
    %c0_i32_0 = arith.constant 0 : i32
    %c0_i32_1 = arith.constant 0 : i32
    %c0_i32_2 = arith.constant 0 : i32
    return %arg0, %c0_i32, %c0_i32_0, %c0_i32_1 : i32, i32, i32, i32
  }
}

</mosaic_0001>

<llo_original>
// kernel: tpu_custom_call.1
$region0: #{tpu_custom_call.1}
  #allocation0 [shape = 'u32[]', space=smem, size = 0x4, offset = 0x4, fixed_abs, tag = 'smem constant byte address 0x4 - core index']
  #allocation1 [shape = 'u32[72,128]{1,0:T(1,128)}', space=vmem, size = 0x9000, scoped, tag = 'internal scratch']
  %s0 = inlined_call_operand.vmem [shape: f32[2,16,16,4], index: 0, kind: input, shape index: {}]
  %s1 = inlined_call_operand.vmem [shape: bf16[36,8], index: 1, kind: input, shape index: {}]
  %s2 = inlined_call_operand.vmem [shape: f32[1,8], index: 2, kind: input, shape index: {}]
  %s3 = inlined_call_operand.vmem [shape: bf16[72,4], index: 3, kind: input, shape index: {}]
  %s4 = inlined_call_operand.vmem [shape: f32[1,4], index: 4, kind: input, shape index: {}]
  %s5 = inlined_call_operand.vmem [shape: f32[2,16,16,4], index: 5, kind: output, shape index: {}]
  %s6 = sld [smem:[#allocation0]]
  $region53: #{tpu_custom_call.1} parent=0
    _
  %s8 = ssub.s32 1, %s6
  %s9 = scalar_select 0, %s8, %s6
  loop: start=0, step=1, limit=4
  $region2: #{tpu_custom_call.1} parent=0 // loop_pre_header
    _
  $region3: #{tpu_custom_call.1} parent=0 // loop_header
    %s11 = sphi 0, %s15
    %p12 = scmp.ge.s32.totalorder %s11, 4
    %s21 = sphi 0, %s23
    %s24 = sphi 0, %s21
    %s25 = sphi 0, %s24
    %s41 = sphi 0, %s25
    %s45 = sphi 0, %s45
    %s47 = sphi 0, %s45
    %s48 = sphi 0, %s47
    %s62 = sphi 0, %s48
    %s66 = sphi 0, %s66
    %s68 = sphi 0, %s66
    %s69 = sphi 0, %s68
    %s83 = sphi 0, %s69
    %s87 = sphi 0, %s87
    %s89 = sphi 0, %s87
    %s90 = sphi 0, %s89
    %s104 = sphi 0, %s90
    %s108 = sphi 0, %s108
    %s110 = sphi 0, %s108
    %s111 = sphi 0, %s110
    %s125 = sphi 0, %s111
    %s131 = sphi 0, %s133
    %s134 = sphi 0, %s131
    %s135 = sphi 0, %s134
    %s151 = sphi 0, %s135
  $region4: #{tpu_custom_call.1} parent=0 // loop_header_branch
    %14 = sbr.rel (%p12) target = $region8
  $region5: #{tpu_custom_call.1} parent=0 // loop_body
    %s16 = ssub.s32 %s11, 1
    %s17 = ssub.s32 %s11, 2
    %s18 = sadd.s32 %s11, 1
    %s19 = ssub.s32 %s11, %s18
    %p20 = scmp.eq.s32.totalorder %s19, 0
    %s22 = sadd.s32 %s21, 1
    %s23 = scalar_select %p20, %s21, %s22
    %p26 = pneg %p20
    %p27 = scmp.eq.s32.totalorder %s11, 1
    %p28 = por %p26, %p27
    %p29 = scmp.ne.s32.totalorder %s21, %s24
    %p30 = scmp.eq.s32.totalorder %s11, 0
    %p31 = por %p29, %p30
    %p32 = scmp.ne.s32.totalorder %s21, %s24
    %p33 = scmp.eq.s32.totalorder %s16, 1
    %p34 = por %p32, %p33
    %p35 = scmp.ne.s32.totalorder %s24, %s25
    %p36 = scmp.eq.s32.totalorder %s16, 0
    %p37 = por %p35, %p36
    %p38 = scmp.ne.s32.totalorder %s24, %s25
    %p39 = scmp.eq.s32.totalorder %s17, 1
    %p40 = por %p38, %p39
    %p42 = scmp.ne.s32.totalorder %s25, %s41
    %p43 = scmp.eq.s32.totalorder %s17, 0
    %p44 = por %p42, %p43
    %s46 = sadd.s32 %s45, 1
    %p49 = scmp.eq.s32.totalorder %s11, 1
    %p50 = scmp.ne.s32.totalorder %s45, %s47
    %p51 = scmp.eq.s32.totalorder %s11, 0
    %p52 = por %p50, %p51
    %p53 = scmp.ne.s32.totalorder %s45, %s47
    %p54 = scmp.eq.s32.totalorder %s16, 1
    %p55 = por %p53, %p54
    %p56 = scmp.ne.s32.totalorder %s47, %s48
    %p57 = scmp.eq.s32.totalorder %s16, 0
    %p58 = por %p56, %p57
    %p59 = scmp.ne.s32.totalorder %s47, %s48
    %p60 = scmp.eq.s32.totalorder %s17, 1
    %p61 = por %p59, %p60
    %p63 = scmp.ne.s32.totalorder %s48, %s62
    %p64 = scmp.eq.s32.totalorder %s17, 0
    %p65 = por %p63, %p64
    %s67 = sadd.s32 %s66, 1
    %p70 = scmp.eq.s32.totalorder %s11, 1
    %p71 = scmp.ne.s32.totalorder %s66, %s68
    %p72 = scmp.eq.s32.totalorder %s11, 0
    %p73 = por %p71, %p72
    %p74 = scmp.ne.s32.totalorder %s66, %s68
    %p75 = scmp.eq.s32.totalorder %s16, 1
    %p76 = por %p74, %p75
    %p77 = scmp.ne.s32.totalorder %s68, %s69
    %p78 = scmp.eq.s32.totalorder %s16, 0
    %p79 = por %p77, %p78
    %p80 = scmp.ne.s32.totalorder %s68, %s69
    %p81 = scmp.eq.s32.totalorder %s17, 1
    %p82 = por %p80, %p81
    %p84 = scmp.ne.s32.totalorder %s69, %s83
    %p85 = scmp.eq.s32.totalorder %s17, 0
    %p86 = por %p84, %p85
    %s88 = sadd.s32 %s87, 1
    %p91 = scmp.eq.s32.totalorder %s11, 1
    %p92 = scmp.ne.s32.totalorder %s87, %s89
    %p93 = scmp.eq.s32.totalorder %s11, 0
    %p94 = por %p92, %p93
    %p95 = scmp.ne.s32.totalorder %s87, %s89
    %p96 = scmp.eq.s32.totalorder %s16, 1
    %p97 = por %p95, %p96
    %p98 = scmp.ne.s32.totalorder %s89, %s90
    %p99 = scmp.eq.s32.totalorder %s16, 0
    %p100 = por %p98, %p99
    %p101 = scmp.ne.s32.totalorder %s89, %s90
    %p102 = scmp.eq.s32.totalorder %s17, 1
    %p103 = por %p101, %p102
    %p105 = scmp.ne.s32.totalorder %s90, %s104
    %p106 = scmp.eq.s32.totalorder %s17, 0
    %p107 = por %p105, %p106
    %s109 = sadd.s32 %s108, 1
    %p112 = scmp.eq.s32.totalorder %s11, 1
    %p113 = scmp.ne.s32.totalorder %s108, %s110
    %p114 = scmp.eq.s32.totalorder %s11, 0
    %p115 = por %p113, %p114
    %p116 = scmp.ne.s32.totalorder %s108, %s110
    %p117 = scmp.eq.s32.totalorder %s16, 1
    %p118 = por %p116, %p117
    %p119 = scmp.ne.s32.totalorder %s110, %s111
    %p120 = scmp.eq.s32.totalorder %s16, 0
    %p121 = por %p119, %p120
    %p122 = scmp.ne.s32.totalorder %s110, %s111
    %p123 = scmp.eq.s32.totalorder %s17, 1
    %p124 = por %p122, %p123
    %p126 = scmp.ne.s32.totalorder %s111, %s125
    %p127 = scmp.eq.s32.totalorder %s17, 0
    %p128 = por %p126, %p127
    %s129 = ssub.s32 %s11, %s18
    %p130 = scmp.eq.s32.totalorder %s129, 0
    %s132 = sadd.s32 %s131, 1
    %s133 = scalar_select %p130, %s131, %s132
    %p136 = pneg %p130
    %p137 = scmp.eq.s32.totalorder %s11, 1
    %p138 = por %p136, %p137
    %p139 = scmp.ne.s32.totalorder %s131, %s134
    %p140 = scmp.eq.s32.totalorder %s11, 0
    %p141 = por %p139, %p140
    %p142 = scmp.ne.s32.totalorder %s131, %s134
    %p143 = scmp.eq.s32.totalorder %s16, 1
    %p144 = por %p142, %p143
    %p145 = scmp.ne.s32.totalorder %s134, %s135
    %p146 = scmp.eq.s32.totalorder %s16, 0
    %p147 = por %p145, %p146
    %p148 = scmp.ne.s32.totalorder %s134, %s135
    %p149 = scmp.eq.s32.totalorder %s17, 1
    %p150 = por %p148, %p149
    %p152 = scmp.ne.s32.totalorder %s135, %s151
    %p153 = scmp.eq.s32.totalorder %s17, 0
    %p154 = por %p152, %p153
    %p155 = scmp.le.s32.totalorder 1, %s11
    %p156 = scmp.lt.s32.totalorder %s11, 3
    %p157 = pnand %p155, %p156
    %p158 = pneg %p157
    // Predicated region
    $region9: #{tpu_custom_call.1} parent=5 // pred_check
      _
    $region10: #{tpu_custom_call.1} parent=5 // pred_check_branch
      %160 = sbr.rel (%p157) target = $region12
    $region11: #{tpu_custom_call.1} parent=5 // pred_region
      %s161 = ssub.s32 %s11, 1
      // Predicated region
      $region13: #{tpu_custom_call.1} parent=11 // pred_check
        %p162 = pneg %p58
      $region14: #{tpu_custom_call.1} parent=11 // pred_check_branch
        %164 = sbr.rel (%p162) target = $region16
      $region15: #{tpu_custom_call.1} parent=11 // pred_region
        _
      $region16: #{tpu_custom_call.1} parent=11 // pred_fallthru
        _
      // Predicated region
      $region17: #{tpu_custom_call.1} parent=11 // pred_check
        %p165 = pneg %p79
      $region18: #{tpu_custom_call.1} parent=11 // pred_check_branch
        %167 = sbr.rel (%p165) target = $region20
      $region19: #{tpu_custom_call.1} parent=11 // pred_region
        _
      $region20: #{tpu_custom_call.1} parent=11 // pred_fallthru
        _
      // Predicated region
      $region21: #{tpu_custom_call.1} parent=11 // pred_check
        %p168 = pneg %p100
      $region22: #{tpu_custom_call.1} parent=11 // pred_check_branch
        %170 = sbr.rel (%p168) target = $region24
      $region23: #{tpu_custom_call.1} parent=11 // pred_region
        _
      $region24: #{tpu_custom_call.1} parent=11 // pred_fallthru
        _
      // Predicated region
      $region25: #{tpu_custom_call.1} parent=11 // pred_check
        %p171 = pneg %p121
      $region26: #{tpu_custom_call.1} parent=11 // pred_check_branch
        %173 = sbr.rel (%p171) target = $region28
      $region27: #{tpu_custom_call.1} parent=11 // pred_region
        _
      $region28: #{tpu_custom_call.1} parent=11 // pred_fallthru
        _
    $region12: #{tpu_custom_call.1} parent=5 // pred_fallthru
      _
    %p174 = scmp.lt.s32.totalorder %s11, 2
    // Predicated region
    $region29: #{tpu_custom_call.1} parent=5 // pred_check
      %p175 = pneg %p174
    $region30: #{tpu_custom_call.1} parent=5 // pred_check_branch
      %177 = sbr.rel (%p175) target = $region32
    $region31: #{tpu_custom_call.1} parent=5 // pred_region
      // Predicated region
      $region33: #{tpu_custom_call.1} parent=31 // pred_check
        %p178 = pneg %p31
      $region34: #{tpu_custom_call.1} parent=31 // pred_check_branch
        %180 = sbr.rel (%p178) target = $region36
      $region35: #{tpu_custom_call.1} parent=31 // pred_region
        %p181 = scmp.lt.s32.totalorder %s11, 1
        %s182 = scalar_select %p181, %s11, 1
        %s183 = smul.addr %s182, 32
        %s184 = smul.addr %s183, 8
        %s185 = scalar_lea.vmem %s0, %s184
      $region36: #{tpu_custom_call.1} parent=31 // pred_fallthru
        _
    $region32: #{tpu_custom_call.1} parent=5 // pred_fallthru
      _
    %p186 = scmp.le.s32.totalorder 1, %s11
    %p187 = scmp.lt.s32.totalorder %s11, 3
    %p188 = pnand %p186, %p187
    %p189 = pneg %p188
    // Predicated region
    $region37: #{tpu_custom_call.1} parent=5 // pred_check
      _
    $region38: #{tpu_custom_call.1} parent=5 // pred_check_branch
      %191 = sbr.rel (%p188) target = $region40
    $region39: #{tpu_custom_call.1} parent=5 // pred_region
      %s192 = ssub.s32 %s11, 1
      %p193 = scmp.lt.s32.totalorder %s16, 1
      %s194 = scalar_select %p193, %s16, 1
      %s195 = smul.addr %s194, 32
      %s196 = smul.addr %s195, 8
      %s197 = scalar_lea.vmem %s0, %s196
      %p198 = pneg %p37
      %p199 = pneg %p34
      %p200 = pneg %p58
      %p201 = pneg %p55
      %p202 = pneg %p79
      %p203 = pneg %p76
      %p204 = pneg %p100
      %p205 = pneg %p97
      %p206 = pneg %p121
      %p207 = pneg %p118
      %p208 = pneg %p147
      %p209 = pneg %p144
      %p210 = scmp.lt.s32.totalorder %s16, 1
      %s211 = scalar_select %p210, %s16, 1
      %s212 = smul.addr %s211, 32
      %s213 = smul.addr %s212, 8
      %s214 = scalar_lea.vmem %s5, %s213
      %p215 = scmp.lt.s32.totalorder %s16, 1
      %s216 = scalar_select %p215, %s16, 1
      %s217 = smul.addr %s216, 32
      %s218 = smul.addr %s217, 8
      %s219 = scalar_lea.vmem %s0, %s218
      %p220 = scmp.lt.s32.totalorder %s16, 1
      %s221 = scalar_select %p220, %s16, 1
      %s222 = smul.addr %s221, 32
      %s223 = smul.addr %s222, 8
      %s224 = scalar_lea.vmem %s5, %s223
      %v226 = vld [vmem:[%s219] sm:$0xff]
      %v227 = vld [vmem:[%s219 + $0x8] sm:$0xff]
      %v228 = vld [vmem:[%s219 + $0x10] sm:$0xff]
      %v229 = vld [vmem:[%s219 + $0x18] sm:$0xff]
      %v230 = vld [vmem:[%s219 + $0x20] sm:$0xff]
      %v231 = vld [vmem:[%s219 + $0x28] sm:$0xff]
      %v232 = vld [vmem:[%s219 + $0x30] sm:$0xff]
      %v233 = vld [vmem:[%s219 + $0x38] sm:$0xff]
      %v234 = vld [vmem:[%s219 + $0x40] sm:$0xff]
      %v235 = vld [vmem:[%s219 + $0x48] sm:$0xff]
      %v236 = vld [vmem:[%s219 + $0x50] sm:$0xff]
      %v237 = vld [vmem:[%s219 + $0x58] sm:$0xff]
      %v238 = vld [vmem:[%s219 + $0x60] sm:$0xff]
      %v239 = vld [vmem:[%s219 + $0x68] sm:$0xff]
      %v240 = vld [vmem:[%s219 + $0x70] sm:$0xff]
      %v241 = vld [vmem:[%s219 + $0x78] sm:$0xff]
      %v242 = vld [vmem:[%s219 + $0x80] sm:$0xff]
      %v243 = vld [vmem:[%s219 + $0x88] sm:$0xff]
      %v244 = vld [vmem:[%s219 + $0x90] sm:$0xff]
      %v245 = vld [vmem:[%s219 + $0x98] sm:$0xff]
      %v246 = vld [vmem:[%s219 + $0xa0] sm:$0xff]
      %v247 = vld [vmem:[%s219 + $0xa8] sm:$0xff]
      %v248 = vld [vmem:[%s219 + $0xb0] sm:$0xff]
      %v249 = vld [vmem:[%s219 + $0xb8] sm:$0xff]
      %v250 = vld [vmem:[%s219 + $0xc0] sm:$0xff]
      %v251 = vld [vmem:[%s219 + $0xc8] sm:$0xff]
      %v252 = vld [vmem:[%s219 + $0xd0] sm:$0xff]
      %v253 = vld [vmem:[%s219 + $0xd8] sm:$0xff]
      %v254 = vld [vmem:[%s219 + $0xe0] sm:$0xff]
      %v255 = vld [vmem:[%s219 + $0xe8] sm:$0xff]
      %v256 = vld [vmem:[%s219 + $0xf0] sm:$0xff]
      %v257 = vld [vmem:[%s219 + $0xf8] sm:$0xff]
      %vm290 = vcmask 1040384
      %v291 = vrot.slane %v226, 7
      %v292 = vrot.slane %v227, 7
      %v293 = vsel %vm290, %v291, %v292
      %v294 = vrot.slane %v228, 7
      %v295 = vrot.slane %v229, 7
      %v296 = vsel %vm290, %v294, %v295
      %v297 = vrot.slane %v230, 7
      %v298 = vrot.slane %v231, 7
      %v299 = vsel %vm290, %v297, %v298
      %v300 = vrot.slane %v232, 7
      %v301 = vrot.slane %v233, 7
      %v302 = vsel %vm290, %v300, %v301
      %v303 = vrot.slane %v234, 7
      %v304 = vrot.slane %v235, 7
      %v305 = vsel %vm290, %v303, %v304
      %v306 = vrot.slane %v236, 7
      %v307 = vrot.slane %v237, 7
      %v308 = vsel %vm290, %v306, %v307
      %v309 = vrot.slane %v238, 7
      %v310 = vrot.slane %v239, 7
      %v311 = vsel %vm290, %v309, %v310
      %v312 = vrot.slane %v240, 7
      %v313 = vrot.slane %v241, 7
      %v314 = vsel %vm290, %v312, %v313
      %v315 = vrot.slane %v242, 7
      %v316 = vrot.slane %v243, 7
      %v317 = vsel %vm290, %v315, %v316
      %v318 = vrot.slane %v244, 7
      %v319 = vrot.slane %v245, 7
      %v320 = vsel %vm290, %v318, %v319
      %v321 = vrot.slane %v246, 7
      %v322 = vrot.slane %v247, 7
      %v323 = vsel %vm290, %v321, %v322
      %v324 = vrot.slane %v248, 7
      %v325 = vrot.slane %v249, 7
      %v326 = vsel %vm290, %v324, %v325
      %v327 = vrot.slane %v250, 7
      %v328 = vrot.slane %v251, 7
      %v329 = vsel %vm290, %v327, %v328
      %v330 = vrot.slane %v252, 7
      %v331 = vrot.slane %v253, 7
      %v332 = vsel %vm290, %v330, %v331
      %v333 = vrot.slane %v254, 7
      %v334 = vrot.slane %v255, 7
      %v335 = vsel %vm290, %v333, %v334
      %v336 = vrot.slane %v256, 7
      %v337 = vrot.slane %v257, 7
      %v338 = vsel %vm290, %v336, %v337
      %v370 = vsel %vm290, 0.0, %v291
      %v371 = vsel %vm290, 0.0, %v294
      %v372 = vsel %vm290, 0.0, %v297
      %v373 = vsel %vm290, 0.0, %v300
      %v374 = vsel %vm290, 0.0, %v303
      %v375 = vsel %vm290, 0.0, %v306
      %v376 = vsel %vm290, 0.0, %v309
      %v377 = vsel %vm290, 0.0, %v312
      %v378 = vsel %vm290, 0.0, %v315
      %v379 = vsel %vm290, 0.0, %v318
      %v380 = vsel %vm290, 0.0, %v321
      %v381 = vsel %vm290, 0.0, %v324
      %v382 = vsel %vm290, 0.0, %v327
      %v383 = vsel %vm290, 0.0, %v330
      %v384 = vsel %vm290, 0.0, %v333
      %v385 = vsel %vm290, 0.0, %v336
      %vm386 = vcmask 1046528
      %v387 = vrot.slane %v226, 1
      %v388 = vrot.slane %v227, 1
      %v389 = vsel %vm386, %v387, %v388
      %v390 = vrot.slane %v228, 1
      %v391 = vrot.slane %v229, 1
      %v392 = vsel %vm386, %v390, %v391
      %v393 = vrot.slane %v230, 1
      %v394 = vrot.slane %v231, 1
      %v395 = vsel %vm386, %v393, %v394
      %v396 = vrot.slane %v232, 1
      %v397 = vrot.slane %v233, 1
      %v398 = vsel %vm386, %v396, %v397
      %v399 = vrot.slane %v234, 1
      %v400 = vrot.slane %v235, 1
      %v401 = vsel %vm386, %v399, %v400
      %v402 = vrot.slane %v236, 1
      %v403 = vrot.slane %v237, 1
      %v404 = vsel %vm386, %v402, %v403
      %v405 = vrot.slane %v238, 1
      %v406 = vrot.slane %v239, 1
      %v407 = vsel %vm386, %v405, %v406
      %v408 = vrot.slane %v240, 1
      %v409 = vrot.slane %v241, 1
      %v410 = vsel %vm386, %v408, %v409
      %v411 = vrot.slane %v242, 1
      %v412 = vrot.slane %v243, 1
      %v413 = vsel %vm386, %v411, %v412
      %v414 = vrot.slane %v244, 1
      %v415 = vrot.slane %v245, 1
      %v416 = vsel %vm386, %v414, %v415
      %v417 = vrot.slane %v246, 1
      %v418 = vrot.slane %v247, 1
      %v419 = vsel %vm386, %v417, %v418
      %v420 = vrot.slane %v248, 1
      %v421 = vrot.slane %v249, 1
      %v422 = vsel %vm386, %v420, %v421
      %v423 = vrot.slane %v250, 1
      %v424 = vrot.slane %v251, 1
      %v425 = vsel %vm386, %v423, %v424
      %v426 = vrot.slane %v252, 1
      %v427 = vrot.slane %v253, 1
      %v428 = vsel %vm386, %v426, %v427
      %v429 = vrot.slane %v254, 1
      %v430 = vrot.slane %v255, 1
      %v431 = vsel %vm386, %v429, %v430
      %v432 = vrot.slane %v256, 1
      %v433 = vrot.slane %v257, 1
      %v434 = vsel %vm386, %v432, %v433
      %v451 = vsel %vm386, %v388, 0.0
      %v452 = vsel %vm386, %v391, 0.0
      %v453 = vsel %vm386, %v394, 0.0
      %v454 = vsel %vm386, %v397, 0.0
      %v455 = vsel %vm386, %v400, 0.0
      %v456 = vsel %vm386, %v403, 0.0
      %v457 = vsel %vm386, %v406, 0.0
      %v458 = vsel %vm386, %v409, 0.0
      %v459 = vsel %vm386, %v412, 0.0
      %v460 = vsel %vm386, %v415, 0.0
      %v461 = vsel %vm386, %v418, 0.0
      %v462 = vsel %vm386, %v421, 0.0
      %v463 = vsel %vm386, %v424, 0.0
      %v464 = vsel %vm386, %v427, 0.0
      %v465 = vsel %vm386, %v430, 0.0
      %v466 = vsel %vm386, %v433, 0.0
      %483 = vrot.lane.b32.xlu0 %v370, 4
      %v484 = vpop.permute.xlu0 %483
      %485 = vrot.lane.b32.xlu0 %v293, 4
      %v486 = vpop.permute.xlu0 %485
      %487 = vrot.lane.b32.xlu0 %v371, 4
      %v488 = vpop.permute.xlu0 %487
      %489 = vrot.lane.b32.xlu0 %v296, 4
      %v490 = vpop.permute.xlu0 %489
      %491 = vrot.lane.b32.xlu0 %v372, 4
      %v492 = vpop.permute.xlu0 %491
      %493 = vrot.lane.b32.xlu0 %v299, 4
      %v494 = vpop.permute.xlu0 %493
      %495 = vrot.lane.b32.xlu0 %v373, 4
      %v496 = vpop.permute.xlu0 %495
      %497 = vrot.lane.b32.xlu0 %v302, 4
      %v498 = vpop.permute.xlu0 %497
      %499 = vrot.lane.b32.xlu0 %v374, 4
      %v500 = vpop.permute.xlu0 %499
      %501 = vrot.lane.b32.xlu0 %v305, 4
      %v502 = vpop.permute.xlu0 %501
      %503 = vrot.lane.b32.xlu0 %v375, 4
      %v504 = vpop.permute.xlu0 %503
      %505 = vrot.lane.b32.xlu0 %v308, 4
      %v506 = vpop.permute.xlu0 %505
      %507 = vrot.lane.b32.xlu0 %v376, 4
      %v508 = vpop.permute.xlu0 %507
      %509 = vrot.lane.b32.xlu0 %v311, 4
      %v510 = vpop.permute.xlu0 %509
      %511 = vrot.lane.b32.xlu0 %v377, 4
      %v512 = vpop.permute.xlu0 %511
      %513 = vrot.lane.b32.xlu0 %v314, 4
      %v514 = vpop.permute.xlu0 %513
      %515 = vrot.lane.b32.xlu0 %v378, 4
      %v516 = vpop.permute.xlu0 %515
      %517 = vrot.lane.b32.xlu0 %v317, 4
      %v518 = vpop.permute.xlu0 %517
      %519 = vrot.lane.b32.xlu0 %v379, 4
      %v520 = vpop.permute.xlu0 %519
      %521 = vrot.lane.b32.xlu0 %v320, 4
      %v522 = vpop.permute.xlu0 %521
      %523 = vrot.lane.b32.xlu0 %v380, 4
      %v524 = vpop.permute.xlu0 %523
      %525 = vrot.lane.b32.xlu0 %v323, 4
      %v526 = vpop.permute.xlu0 %525
      %527 = vrot.lane.b32.xlu0 %v381, 4
      %v528 = vpop.permute.xlu0 %527
      %529 = vrot.lane.b32.xlu0 %v326, 4
      %v530 = vpop.permute.xlu0 %529
      %531 = vrot.lane.b32.xlu0 %v382, 4
      %v532 = vpop.permute.xlu0 %531
      %533 = vrot.lane.b32.xlu0 %v329, 4
      %v534 = vpop.permute.xlu0 %533
      %535 = vrot.lane.b32.xlu0 %v383, 4
      %v536 = vpop.permute.xlu0 %535
      %537 = vrot.lane.b32.xlu0 %v332, 4
      %v538 = vpop.permute.xlu0 %537
      %539 = vrot.lane.b32.xlu0 %v384, 4
      %v540 = vpop.permute.xlu0 %539
      %541 = vrot.lane.b32.xlu0 %v335, 4
      %v542 = vpop.permute.xlu0 %541
      %543 = vrot.lane.b32.xlu0 %v385, 4
      %v544 = vpop.permute.xlu0 %543
      %545 = vrot.lane.b32.xlu0 %v338, 4
      %v546 = vpop.permute.xlu0 %545
      %580 = vrot.lane.b32.xlu0 %v371, 8
      %v581 = vpop.permute.xlu0 %580
      %582 = vrot.lane.b32.xlu0 %v296, 8
      %v583 = vpop.permute.xlu0 %582
      %584 = vrot.lane.b32.xlu0 %v372, 8
      %v585 = vpop.permute.xlu0 %584
      %586 = vrot.lane.b32.xlu0 %v299, 8
      %v587 = vpop.permute.xlu0 %586
      %588 = vrot.lane.b32.xlu0 %v373, 8
      %v589 = vpop.permute.xlu0 %588
      %590 = vrot.lane.b32.xlu0 %v302, 8
      %v591 = vpop.permute.xlu0 %590
      %592 = vrot.lane.b32.xlu0 %v374, 8
      %v593 = vpop.permute.xlu0 %592
      %594 = vrot.lane.b32.xlu0 %v305, 8
      %v595 = vpop.permute.xlu0 %594
      %596 = vrot.lane.b32.xlu0 %v375, 8
      %v597 = vpop.permute.xlu0 %596
      %598 = vrot.lane.b32.xlu0 %v308, 8
      %v599 = vpop.permute.xlu0 %598
      %600 = vrot.lane.b32.xlu0 %v376, 8
      %v601 = vpop.permute.xlu0 %600
      %602 = vrot.lane.b32.xlu0 %v311, 8
      %v603 = vpop.permute.xlu0 %602
      %604 = vrot.lane.b32.xlu0 %v377, 8
      %v605 = vpop.permute.xlu0 %604
      %606 = vrot.lane.b32.xlu0 %v314, 8
      %v607 = vpop.permute.xlu0 %606
      %608 = vrot.lane.b32.xlu0 %v378, 8
      %v609 = vpop.permute.xlu0 %608
      %610 = vrot.lane.b32.xlu0 %v317, 8
      %v611 = vpop.permute.xlu0 %610
      %612 = vrot.lane.b32.xlu0 %v379, 8
      %v613 = vpop.permute.xlu0 %612
      %614 = vrot.lane.b32.xlu0 %v320, 8
      %v615 = vpop.permute.xlu0 %614
      %616 = vrot.lane.b32.xlu0 %v380, 8
      %v617 = vpop.permute.xlu0 %616
      %618 = vrot.lane.b32.xlu0 %v323, 8
      %v619 = vpop.permute.xlu0 %618
      %620 = vrot.lane.b32.xlu0 %v381, 8
      %v621 = vpop.permute.xlu0 %620
      %622 = vrot.lane.b32.xlu0 %v326, 8
      %v623 = vpop.permute.xlu0 %622
      %624 = vrot.lane.b32.xlu0 %v382, 8
      %v625 = vpop.permute.xlu0 %624
      %626 = vrot.lane.b32.xlu0 %v329, 8
      %v627 = vpop.permute.xlu0 %626
      %628 = vrot.lane.b32.xlu0 %v383, 8
      %v629 = vpop.permute.xlu0 %628
      %630 = vrot.lane.b32.xlu0 %v332, 8
      %v631 = vpop.permute.xlu0 %630
      %632 = vrot.lane.b32.xlu0 %v384, 8
      %v633 = vpop.permute.xlu0 %632
      %634 = vrot.lane.b32.xlu0 %v335, 8
      %v635 = vpop.permute.xlu0 %634
      %636 = vrot.lane.b32.xlu0 %v385, 8
      %v637 = vpop.permute.xlu0 %636
      %638 = vrot.lane.b32.xlu0 %v338, 8
      %v639 = vpop.permute.xlu0 %638
      %640 = vrot.lane.b32.xlu0 0.0, 8
      %v641 = vpop.permute.xlu0 %640
      %673 = vrot.lane.b32.xlu0 0.0, 12
      %v674 = vpop.permute.xlu0 %673
      %675 = vrot.lane.b32.xlu0 %v226, 12
      %v676 = vpop.permute.xlu0 %675
      %677 = vrot.lane.b32.xlu0 %v227, 12
      %v678 = vpop.permute.xlu0 %677
      %679 = vrot.lane.b32.xlu0 %v228, 12
      %v680 = vpop.permute.xlu0 %679
      %681 = vrot.lane.b32.xlu0 %v229, 12
      %v682 = vpop.permute.xlu0 %681
      %683 = vrot.lane.b32.xlu0 %v230, 12
      %v684 = vpop.permute.xlu0 %683
      %685 = vrot.lane.b32.xlu0 %v231, 12
      %v686 = vpop.permute.xlu0 %685
      %687 = vrot.lane.b32.xlu0 %v232, 12
      %v688 = vpop.permute.xlu0 %687
      %689 = vrot.lane.b32.xlu0 %v233, 12
      %v690 = vpop.permute.xlu0 %689
      %691 = vrot.lane.b32.xlu0 %v234, 12
      %v692 = vpop.permute.xlu0 %691
      %693 = vrot.lane.b32.xlu0 %v235, 12
      %v694 = vpop.permute.xlu0 %693
      %695 = vrot.lane.b32.xlu0 %v236, 12
      %v696 = vpop.permute.xlu0 %695
      %697 = vrot.lane.b32.xlu0 %v237, 12
      %v698 = vpop.permute.xlu0 %697
      %699 = vrot.lane.b32.xlu0 %v238, 12
      %v700 = vpop.permute.xlu0 %699
      %701 = vrot.lane.b32.xlu0 %v239, 12
      %v702 = vpop.permute.xlu0 %701
      %703 = vrot.lane.b32.xlu0 %v240, 12
      %v704 = vpop.permute.xlu0 %703
      %705 = vrot.lane.b32.xlu0 %v241, 12
      %v706 = vpop.permute.xlu0 %705
      %707 = vrot.lane.b32.xlu0 %v242, 12
      %v708 = vpop.permute.xlu0 %707
      %709 = vrot.lane.b32.xlu0 %v243, 12
      %v710 = vpop.permute.xlu0 %709
      %711 = vrot.lane.b32.xlu0 %v244, 12
      %v712 = vpop.permute.xlu0 %711
      %713 = vrot.lane.b32.xlu0 %v245, 12
      %v714 = vpop.permute.xlu0 %713
      %715 = vrot.lane.b32.xlu0 %v246, 12
      %v716 = vpop.permute.xlu0 %715
      %717 = vrot.lane.b32.xlu0 %v247, 12
      %v718 = vpop.permute.xlu0 %717
      %719 = vrot.lane.b32.xlu0 %v248, 12
      %v720 = vpop.permute.xlu0 %719
      %721 = vrot.lane.b32.xlu0 %v249, 12
      %v722 = vpop.permute.xlu0 %721
      %723 = vrot.lane.b32.xlu0 %v250, 12
      %v724 = vpop.permute.xlu0 %723
      %725 = vrot.lane.b32.xlu0 %v251, 12
      %v726 = vpop.permute.xlu0 %725
      %727 = vrot.lane.b32.xlu0 %v252, 12
      %v728 = vpop.permute.xlu0 %727
      %729 = vrot.lane.b32.xlu0 %v253, 12
      %v730 = vpop.permute.xlu0 %729
      %731 = vrot.lane.b32.xlu0 %v254, 12
      %v732 = vpop.permute.xlu0 %731
      %733 = vrot.lane.b32.xlu0 %v255, 12
      %v734 = vpop.permute.xlu0 %733
      %766 = vrot.lane.b32.xlu0 %v226, 16
      %v767 = vpop.permute.xlu0 %766
      %768 = vrot.lane.b32.xlu0 %v227, 16
      %v769 = vpop.permute.xlu0 %768
      %770 = vrot.lane.b32.xlu0 %v228, 16
      %v771 = vpop.permute.xlu0 %770
      %772 = vrot.lane.b32.xlu0 %v229, 16
      %v773 = vpop.permute.xlu0 %772
      %774 = vrot.lane.b32.xlu0 %v230, 16
      %v775 = vpop.permute.xlu0 %774
      %776 = vrot.lane.b32.xlu0 %v231, 16
      %v777 = vpop.permute.xlu0 %776
      %778 = vrot.lane.b32.xlu0 %v232, 16
      %v779 = vpop.permute.xlu0 %778
      %780 = vrot.lane.b32.xlu0 %v233, 16
      %v781 = vpop.permute.xlu0 %780
      %782 = vrot.lane.b32.xlu0 %v234, 16
      %v783 = vpop.permute.xlu0 %782
      %784 = vrot.lane.b32.xlu0 %v235, 16
      %v785 = vpop.permute.xlu0 %784
      %786 = vrot.lane.b32.xlu0 %v236, 16
      %v787 = vpop.permute.xlu0 %786
      %788 = vrot.lane.b32.xlu0 %v237, 16
      %v789 = vpop.permute.xlu0 %788
      %790 = vrot.lane.b32.xlu0 %v238, 16
      %v791 = vpop.permute.xlu0 %790
      %792 = vrot.lane.b32.xlu0 %v239, 16
      %v793 = vpop.permute.xlu0 %792
      %794 = vrot.lane.b32.xlu0 %v240, 16
      %v795 = vpop.permute.xlu0 %794
      %796 = vrot.lane.b32.xlu0 %v241, 16
      %v797 = vpop.permute.xlu0 %796
      %798 = vrot.lane.b32.xlu0 %v242, 16
      %v799 = vpop.permute.xlu0 %798
      %800 = vrot.lane.b32.xlu0 %v243, 16
      %v801 = vpop.permute.xlu0 %800
      %802 = vrot.lane.b32.xlu0 %v244, 16
      %v803 = vpop.permute.xlu0 %802
      %804 = vrot.lane.b32.xlu0 %v245, 16
      %v805 = vpop.permute.xlu0 %804
      %806 = vrot.lane.b32.xlu0 %v246, 16
      %v807 = vpop.permute.xlu0 %806
      %808 = vrot.lane.b32.xlu0 %v247, 16
      %v809 = vpop.permute.xlu0 %808
      %810 = vrot.lane.b32.xlu0 %v248, 16
      %v811 = vpop.permute.xlu0 %810
      %812 = vrot.lane.b32.xlu0 %v249, 16
      %v813 = vpop.permute.xlu0 %812
      %814 = vrot.lane.b32.xlu0 %v250, 16
      %v815 = vpop.permute.xlu0 %814
      %816 = vrot.lane.b32.xlu0 %v251, 16
      %v817 = vpop.permute.xlu0 %816
      %818 = vrot.lane.b32.xlu0 %v252, 16
      %v819 = vpop.permute.xlu0 %818
      %820 = vrot.lane.b32.xlu0 %v253, 16
      %v821 = vpop.permute.xlu0 %820
      %822 = vrot.lane.b32.xlu0 %v254, 16
      %v823 = vpop.permute.xlu0 %822
      %824 = vrot.lane.b32.xlu0 %v255, 16
      %v825 = vpop.permute.xlu0 %824
      %826 = vrot.lane.b32.xlu0 %v256, 16
      %v827 = vpop.permute.xlu0 %826
      %828 = vrot.lane.b32.xlu0 %v257, 16
      %v829 = vpop.permute.xlu0 %828
      %862 = vrot.lane.b32.xlu0 %v228, 20
      %v863 = vpop.permute.xlu0 %862
      %864 = vrot.lane.b32.xlu0 %v229, 20
      %v865 = vpop.permute.xlu0 %864
      %866 = vrot.lane.b32.xlu0 %v230, 20
      %v867 = vpop.permute.xlu0 %866
      %868 = vrot.lane.b32.xlu0 %v231, 20
      %v869 = vpop.permute.xlu0 %868
      %870 = vrot.lane.b32.xlu0 %v232, 20
      %v871 = vpop.permute.xlu0 %870
      %872 = vrot.lane.b32.xlu0 %v233, 20
      %v873 = vpop.permute.xlu0 %872
      %874 = vrot.lane.b32.xlu0 %v234, 20
      %v875 = vpop.permute.xlu0 %874
      %876 = vrot.lane.b32.xlu0 %v235, 20
      %v877 = vpop.permute.xlu0 %876
      %878 = vrot.lane.b32.xlu0 %v236, 20
      %v879 = vpop.permute.xlu0 %878
      %880 = vrot.lane.b32.xlu0 %v237, 20
      %v881 = vpop.permute.xlu0 %880
      %882 = vrot.lane.b32.xlu0 %v238, 20
      %v883 = vpop.permute.xlu0 %882
      %884 = vrot.lane.b32.xlu0 %v239, 20
      %v885 = vpop.permute.xlu0 %884
      %886 = vrot.lane.b32.xlu0 %v240, 20
      %v887 = vpop.permute.xlu0 %886
      %888 = vrot.lane.b32.xlu0 %v241, 20
      %v889 = vpop.permute.xlu0 %888
      %890 = vrot.lane.b32.xlu0 %v242, 20
      %v891 = vpop.permute.xlu0 %890
      %892 = vrot.lane.b32.xlu0 %v243, 20
      %v893 = vpop.permute.xlu0 %892
      %894 = vrot.lane.b32.xlu0 %v244, 20
      %v895 = vpop.permute.xlu0 %894
      %896 = vrot.lane.b32.xlu0 %v245, 20
      %v897 = vpop.permute.xlu0 %896
      %898 = vrot.lane.b32.xlu0 %v246, 20
      %v899 = vpop.permute.xlu0 %898
      %900 = vrot.lane.b32.xlu0 %v247, 20
      %v901 = vpop.permute.xlu0 %900
      %902 = vrot.lane.b32.xlu0 %v248, 20
      %v903 = vpop.permute.xlu0 %902
      %904 = vrot.lane.b32.xlu0 %v249, 20
      %v905 = vpop.permute.xlu0 %904
      %906 = vrot.lane.b32.xlu0 %v250, 20
      %v907 = vpop.permute.xlu0 %906
      %908 = vrot.lane.b32.xlu0 %v251, 20
      %v909 = vpop.permute.xlu0 %908
      %910 = vrot.lane.b32.xlu0 %v252, 20
      %v911 = vpop.permute.xlu0 %910
      %912 = vrot.lane.b32.xlu0 %v253, 20
      %v913 = vpop.permute.xlu0 %912
      %914 = vrot.lane.b32.xlu0 %v254, 20
      %v915 = vpop.permute.xlu0 %914
      %916 = vrot.lane.b32.xlu0 %v255, 20
      %v917 = vpop.permute.xlu0 %916
      %918 = vrot.lane.b32.xlu0 %v256, 20
      %v919 = vpop.permute.xlu0 %918
      %920 = vrot.lane.b32.xlu0 %v257, 20
      %v921 = vpop.permute.xlu0 %920
      %922 = vrot.lane.b32.xlu0 0.0, 20
      %v923 = vpop.permute.xlu0 %922
      %970 = vrot.lane.b32.xlu0 0.0, 24
      %v971 = vpop.permute.xlu0 %970
      %972 = vrot.lane.b32.xlu0 %v389, 24
      %v973 = vpop.permute.xlu0 %972
      %974 = vrot.lane.b32.xlu0 %v451, 24
      %v975 = vpop.permute.xlu0 %974
      %976 = vrot.lane.b32.xlu0 %v392, 24
      %v977 = vpop.permute.xlu0 %976
      %978 = vrot.lane.b32.xlu0 %v452, 24
      %v979 = vpop.permute.xlu0 %978
      %980 = vrot.lane.b32.xlu0 %v395, 24
      %v981 = vpop.permute.xlu0 %980
      %982 = vrot.lane.b32.xlu0 %v453, 24
      %v983 = vpop.permute.xlu0 %982
      %984 = vrot.lane.b32.xlu0 %v398, 24
      %v985 = vpop.permute.xlu0 %984
      %986 = vrot.lane.b32.xlu0 %v454, 24
      %v987 = vpop.permute.xlu0 %986
      %988 = vrot.lane.b32.xlu0 %v401, 24
      %v989 = vpop.permute.xlu0 %988
      %990 = vrot.lane.b32.xlu0 %v455, 24
      %v991 = vpop.permute.xlu0 %990
      %992 = vrot.lane.b32.xlu0 %v404, 24
      %v993 = vpop.permute.xlu0 %992
      %994 = vrot.lane.b32.xlu0 %v456, 24
      %v995 = vpop.permute.xlu0 %994
      %996 = vrot.lane.b32.xlu0 %v407, 24
      %v997 = vpop.permute.xlu0 %996
      %998 = vrot.lane.b32.xlu0 %v457, 24
      %v999 = vpop.permute.xlu0 %998
      %1000 = vrot.lane.b32.xlu0 %v410, 24
      %v1001 = vpop.permute.xlu0 %1000
      %1002 = vrot.lane.b32.xlu0 %v458, 24
      %v1003 = vpop.permute.xlu0 %1002
      %1004 = vrot.lane.b32.xlu0 %v413, 24
      %v1005 = vpop.permute.xlu0 %1004
      %1006 = vrot.lane.b32.xlu0 %v459, 24
      %v1007 = vpop.permute.xlu0 %1006
      %1008 = vrot.lane.b32.xlu0 %v416, 24
      %v1009 = vpop.permute.xlu0 %1008
      %1010 = vrot.lane.b32.xlu0 %v460, 24
      %v1011 = vpop.permute.xlu0 %1010
      %1012 = vrot.lane.b32.xlu0 %v419, 24
      %v1013 = vpop.permute.xlu0 %1012
      %1014 = vrot.lane.b32.xlu0 %v461, 24
      %v1015 = vpop.permute.xlu0 %1014
      %1016 = vrot.lane.b32.xlu0 %v422, 24
      %v1017 = vpop.permute.xlu0 %1016
      %1018 = vrot.lane.b32.xlu0 %v462, 24
      %v1019 = vpop.permute.xlu0 %1018
      %1020 = vrot.lane.b32.xlu0 %v425, 24
      %v1021 = vpop.permute.xlu0 %1020
      %1022 = vrot.lane.b32.xlu0 %v463, 24
      %v1023 = vpop.permute.xlu0 %1022
      %1024 = vrot.lane.b32.xlu0 %v428, 24
      %v1025 = vpop.permute.xlu0 %1024
      %1026 = vrot.lane.b32.xlu0 %v464, 24
      %v1027 = vpop.permute.xlu0 %1026
      %1028 = vrot.lane.b32.xlu0 %v431, 24
      %v1029 = vpop.permute.xlu0 %1028
      %1030 = vrot.lane.b32.xlu0 %v465, 24
      %v1031 = vpop.permute.xlu0 %1030
      %1064 = vrot.lane.b32.xlu0 %v389, 28
      %v1065 = vpop.permute.xlu0 %1064
      %1066 = vrot.lane.b32.xlu0 %v451, 28
      %v1067 = vpop.permute.xlu0 %1066
      %1068 = vrot.lane.b32.xlu0 %v392, 28
      %v1069 = vpop.permute.xlu0 %1068
      %1070 = vrot.lane.b32.xlu0 %v452, 28
      %v1071 = vpop.permute.xlu0 %1070
      %1072 = vrot.lane.b32.xlu0 %v395, 28
      %v1073 = vpop.permute.xlu0 %1072
      %1074 = vrot.lane.b32.xlu0 %v453, 28
      %v1075 = vpop.permute.xlu0 %1074
      %1076 = vrot.lane.b32.xlu0 %v398, 28
      %v1077 = vpop.permute.xlu0 %1076
      %1078 = vrot.lane.b32.xlu0 %v454, 28
      %v1079 = vpop.permute.xlu0 %1078
      %1080 = vrot.lane.b32.xlu0 %v401, 28
      %v1081 = vpop.permute.xlu0 %1080
      %1082 = vrot.lane.b32.xlu0 %v455, 28
      %v1083 = vpop.permute.xlu0 %1082
      %1084 = vrot.lane.b32.xlu0 %v404, 28
      %v1085 = vpop.permute.xlu0 %1084
      %1086 = vrot.lane.b32.xlu0 %v456, 28
      %v1087 = vpop.permute.xlu0 %1086
      %1088 = vrot.lane.b32.xlu0 %v407, 28
      %v1089 = vpop.permute.xlu0 %1088
      %1090 = vrot.lane.b32.xlu0 %v457, 28
      %v1091 = vpop.permute.xlu0 %1090
      %1092 = vrot.lane.b32.xlu0 %v410, 28
      %v1093 = vpop.permute.xlu0 %1092
      %1094 = vrot.lane.b32.xlu0 %v458, 28
      %v1095 = vpop.permute.xlu0 %1094
      %1096 = vrot.lane.b32.xlu0 %v413, 28
      %v1097 = vpop.permute.xlu0 %1096
      %1098 = vrot.lane.b32.xlu0 %v459, 28
      %v1099 = vpop.permute.xlu0 %1098
      %1100 = vrot.lane.b32.xlu0 %v416, 28
      %v1101 = vpop.permute.xlu0 %1100
      %1102 = vrot.lane.b32.xlu0 %v460, 28
      %v1103 = vpop.permute.xlu0 %1102
      %1104 = vrot.lane.b32.xlu0 %v419, 28
      %v1105 = vpop.permute.xlu0 %1104
      %1106 = vrot.lane.b32.xlu0 %v461, 28
      %v1107 = vpop.permute.xlu0 %1106
      %1108 = vrot.lane.b32.xlu0 %v422, 28
      %v1109 = vpop.permute.xlu0 %1108
      %1110 = vrot.lane.b32.xlu0 %v462, 28
      %v1111 = vpop.permute.xlu0 %1110
      %1112 = vrot.lane.b32.xlu0 %v425, 28
      %v1113 = vpop.permute.xlu0 %1112
      %1114 = vrot.lane.b32.xlu0 %v463, 28
      %v1115 = vpop.permute.xlu0 %1114
      %1116 = vrot.lane.b32.xlu0 %v428, 28
      %v1117 = vpop.permute.xlu0 %1116
      %1118 = vrot.lane.b32.xlu0 %v464, 28
      %v1119 = vpop.permute.xlu0 %1118
      %1120 = vrot.lane.b32.xlu0 %v431, 28
      %v1121 = vpop.permute.xlu0 %1120
      %1122 = vrot.lane.b32.xlu0 %v465, 28
      %v1123 = vpop.permute.xlu0 %1122
      %1124 = vrot.lane.b32.xlu0 %v434, 28
      %v1125 = vpop.permute.xlu0 %1124
      %1126 = vrot.lane.b32.xlu0 %v466, 28
      %v1127 = vpop.permute.xlu0 %1126
      %1160 = vrot.lane.b32.xlu0 %v392, 32
      %v1161 = vpop.permute.xlu0 %1160
      %1162 = vrot.lane.b32.xlu0 %v452, 32
      %v1163 = vpop.permute.xlu0 %1162
      %1164 = vrot.lane.b32.xlu0 %v395, 32
      %v1165 = vpop.permute.xlu0 %1164
      %1166 = vrot.lane.b32.xlu0 %v453, 32
      %v1167 = vpop.permute.xlu0 %1166
      %1168 = vrot.lane.b32.xlu0 %v398, 32
      %v1169 = vpop.permute.xlu0 %1168
      %1170 = vrot.lane.b32.xlu0 %v454, 32
      %v1171 = vpop.permute.xlu0 %1170
      %1172 = vrot.lane.b32.xlu0 %v401, 32
      %v1173 = vpop.permute.xlu0 %1172
      %1174 = vrot.lane.b32.xlu0 %v455, 32
      %v1175 = vpop.permute.xlu0 %1174
      %1176 = vrot.lane.b32.xlu0 %v404, 32
      %v1177 = vpop.permute.xlu0 %1176
      %1178 = vrot.lane.b32.xlu0 %v456, 32
      %v1179 = vpop.permute.xlu0 %1178
      %1180 = vrot.lane.b32.xlu0 %v407, 32
      %v1181 = vpop.permute.xlu0 %1180
      %1182 = vrot.lane.b32.xlu0 %v457, 32
      %v1183 = vpop.permute.xlu0 %1182
      %1184 = vrot.lane.b32.xlu0 %v410, 32
      %v1185 = vpop.permute.xlu0 %1184
      %1186 = vrot.lane.b32.xlu0 %v458, 32
      %v1187 = vpop.permute.xlu0 %1186
      %1188 = vrot.lane.b32.xlu0 %v413, 32
      %v1189 = vpop.permute.xlu0 %1188
      %1190 = vrot.lane.b32.xlu0 %v459, 32
      %v1191 = vpop.permute.xlu0 %1190
      %1192 = vrot.lane.b32.xlu0 %v416, 32
      %v1193 = vpop.permute.xlu0 %1192
      %1194 = vrot.lane.b32.xlu0 %v460, 32
      %v1195 = vpop.permute.xlu0 %1194
      %1196 = vrot.lane.b32.xlu0 %v419, 32
      %v1197 = vpop.permute.xlu0 %1196
      %1198 = vrot.lane.b32.xlu0 %v461, 32
      %v1199 = vpop.permute.xlu0 %1198
      %1200 = vrot.lane.b32.xlu0 %v422, 32
      %v1201 = vpop.permute.xlu0 %1200
      %1202 = vrot.lane.b32.xlu0 %v462, 32
      %v1203 = vpop.permute.xlu0 %1202
      %1204 = vrot.lane.b32.xlu0 %v425, 32
      %v1205 = vpop.permute.xlu0 %1204
      %1206 = vrot.lane.b32.xlu0 %v463, 32
      %v1207 = vpop.permute.xlu0 %1206
      %1208 = vrot.lane.b32.xlu0 %v428, 32
      %v1209 = vpop.permute.xlu0 %1208
      %1210 = vrot.lane.b32.xlu0 %v464, 32
      %v1211 = vpop.permute.xlu0 %1210
      %1212 = vrot.lane.b32.xlu0 %v431, 32
      %v1213 = vpop.permute.xlu0 %1212
      %1214 = vrot.lane.b32.xlu0 %v465, 32
      %v1215 = vpop.permute.xlu0 %1214
      %1216 = vrot.lane.b32.xlu0 %v434, 32
      %v1217 = vpop.permute.xlu0 %1216
      %1218 = vrot.lane.b32.xlu0 %v466, 32
      %v1219 = vpop.permute.xlu0 %1218
      %1220 = vrot.lane.b32.xlu0 0.0, 32
      %v1221 = vpop.permute.xlu0 %1220
      %vm1253 = vcmask 31744
      %v1254 = vsel %vm1253, 0.0, %v484
      %v1255 = vsel %vm1253, 0.0, %v486
      %v1256 = vsel %vm1253, %v370, %v488
      %v1257 = vsel %vm1253, %v293, %v490
      %v1258 = vsel %vm1253, %v371, %v492
      %v1259 = vsel %vm1253, %v296, %v494
      %v1260 = vsel %vm1253, %v372, %v496
      %v1261 = vsel %vm1253, %v299, %v498
      %v1262 = vsel %vm1253, %v373, %v500
      %v1263 = vsel %vm1253, %v302, %v502
      %v1264 = vsel %vm1253, %v374, %v504
      %v1265 = vsel %vm1253, %v305, %v506
      %v1266 = vsel %vm1253, %v375, %v508
      %v1267 = vsel %vm1253, %v308, %v510
      %v1268 = vsel %vm1253, %v376, %v512
      %v1269 = vsel %vm1253, %v311, %v514
      %v1270 = vsel %vm1253, %v377, %v516
      %v1271 = vsel %vm1253, %v314, %v518
      %v1272 = vsel %vm1253, %v378, %v520
      %v1273 = vsel %vm1253, %v317, %v522
      %v1274 = vsel %vm1253, %v379, %v524
      %v1275 = vsel %vm1253, %v320, %v526
      %v1276 = vsel %vm1253, %v380, %v528
      %v1277 = vsel %vm1253, %v323, %v530
      %v1278 = vsel %vm1253, %v381, %v532
      %v1279 = vsel %vm1253, %v326, %v534
      %v1280 = vsel %vm1253, %v382, %v536
      %v1281 = vsel %vm1253, %v329, %v538
      %v1282 = vsel %vm1253, %v383, %v540
      %v1283 = vsel %vm1253, %v332, %v542
      %v1284 = vsel %vm1253, %v384, %v544
      %v1285 = vsel %vm1253, %v335, %v546
      %vm1286 = vcmask 64512
      %v1287 = vsel %vm1286, %v1254, %v581
      %v1288 = vsel %vm1286, %v1255, %v583
      %v1289 = vsel %vm1286, %v1256, %v585
      %v1290 = vsel %vm1286, %v1257, %v587
      %v1291 = vsel %vm1286, %v1258, %v589
      %v1292 = vsel %vm1286, %v1259, %v591
      %v1293 = vsel %vm1286, %v1260, %v593
      %v1294 = vsel %vm1286, %v1261, %v595
      %v1295 = vsel %vm1286, %v1262, %v597
      %v1296 = vsel %vm1286, %v1263, %v599
      %v1297 = vsel %vm1286, %v1264, %v601
      %v1298 = vsel %vm1286, %v1265, %v603
      %v1299 = vsel %vm1286, %v1266, %v605
      %v1300 = vsel %vm1286, %v1267, %v607
      %v1301 = vsel %vm1286, %v1268, %v609
      %v1302 = vsel %vm1286, %v1269, %v611
      %v1303 = vsel %vm1286, %v1270, %v613
      %v1304 = vsel %vm1286, %v1271, %v615
      %v1305 = vsel %vm1286, %v1272, %v617
      %v1306 = vsel %vm1286, %v1273, %v619
      %v1307 = vsel %vm1286, %v1274, %v621
      %v1308 = vsel %vm1286, %v1275, %v623
      %v1309 = vsel %vm1286, %v1276, %v625
      %v1310 = vsel %vm1286, %v1277, %v627
      %v1311 = vsel %vm1286, %v1278, %v629
      %v1312 = vsel %vm1286, %v1279, %v631
      %v1313 = vsel %vm1286, %v1280, %v633
      %v1314 = vsel %vm1286, %v1281, %v635
      %v1315 = vsel %vm1286, %v1282, %v637
      %v1316 = vsel %vm1286, %v1283, %v639
      %v1317 = vsel %vm1286, %v1284, %v641
      %v1318 = vsel %vm1286, %v1285, %v641
      %vm1319 = vcmask 97280
      %v1320 = vsel %vm1319, %v1287, %v674
      %v1321 = vsel %vm1319, %v1288, %v674
      %v1322 = vsel %vm1319, %v1289, %v676
      %v1323 = vsel %vm1319, %v1290, %v678
      %v1324 = vsel %vm1319, %v1291, %v680
      %v1325 = vsel %vm1319, %v1292, %v682
      %v1326 = vsel %vm1319, %v1293, %v684
      %v1327 = vsel %vm1319, %v1294, %v686
      %v1328 = vsel %vm1319, %v1295, %v688
      %v1329 = vsel %vm1319, %v1296, %v690
      %v1330 = vsel %vm1319, %v1297, %v692
      %v1331 = vsel %vm1319, %v1298, %v694
      %v1332 = vsel %vm1319, %v1299, %v696
      %v1333 = vsel %vm1319, %v1300, %v698
      %v1334 = vsel %vm1319, %v1301, %v700
      %v1335 = vsel %vm1319, %v1302, %v702
      %v1336 = vsel %vm1319, %v1303, %v704
      %v1337 = vsel %vm1319, %v1304, %v706
      %v1338 = vsel %vm1319, %v1305, %v708
      %v1339 = vsel %vm1319, %v1306, %v710
      %v1340 = vsel %vm1319, %v1307, %v712
      %v1341 = vsel %vm1319, %v1308, %v714
      %v1342 = vsel %vm1319, %v1309, %v716
      %v1343 = vsel %vm1319, %v1310, %v718
      %v1344 = vsel %vm1319, %v1311, %v720
      %v1345 = vsel %vm1319, %v1312, %v722
      %v1346 = vsel %vm1319, %v1313, %v724
      %v1347 = vsel %vm1319, %v1314, %v726
      %v1348 = vsel %vm1319, %v1315, %v728
      %v1349 = vsel %vm1319, %v1316, %v730
      %v1350 = vsel %vm1319, %v1317, %v732
      %v1351 = vsel %vm1319, %v1318, %v734
      %vm1352 = vcmask 130048
      %v1353 = vsel %vm1352, %v1320, %v767
      %v1354 = vsel %vm1352, %v1321, %v769
      %v1355 = vsel %vm1352, %v1322, %v771
      %v1356 = vsel %vm1352, %v1323, %v773
      %v1357 = vsel %vm1352, %v1324, %v775
      %v1358 = vsel %vm1352, %v1325, %v777
      %v1359 = vsel %vm1352, %v1326, %v779
      %v1360 = vsel %vm1352, %v1327, %v781
      %v1361 = vsel %vm1352, %v1328, %v783
      %v1362 = vsel %vm1352, %v1329, %v785
      %v1363 = vsel %vm1352, %v1330, %v787
      %v1364 = vsel %vm1352, %v1331, %v789
      %v1365 = vsel %vm1352, %v1332, %v791
      %v1366 = vsel %vm1352, %v1333, %v793
      %v1367 = vsel %vm1352, %v1334, %v795
      %v1368 = vsel %vm1352, %v1335, %v797
      %v1369 = vsel %vm1352, %v1336, %v799
      %v1370 = vsel %vm1352, %v1337, %v801
      %v1371 = vsel %vm1352, %v1338, %v803
      %v1372 = vsel %vm1352, %v1339, %v805
      %v1373 = vsel %vm1352, %v1340, %v807
      %v1374 = vsel %vm1352, %v1341, %v809
      %v1375 = vsel %vm1352, %v1342, %v811
      %v1376 = vsel %vm1352, %v1343, %v813
      %v1377 = vsel %vm1352, %v1344, %v815
      %v1378 = vsel %vm1352, %v1345, %v817
      %v1379 = vsel %vm1352, %v1346, %v819
      %v1380 = vsel %vm1352, %v1347, %v821
      %v1381 = vsel %vm1352, %v1348, %v823
      %v1382 = vsel %vm1352, %v1349, %v825
      %v1383 = vsel %vm1352, %v1350, %v827
      %v1384 = vsel %vm1352, %v1351, %v829
      %vm1385 = vcmask 162816
      %v1386 = vsel %vm1385, %v1353, %v863
      %v1387 = vsel %vm1385, %v1354, %v865
      %v1388 = vsel %vm1385, %v1355, %v867
      %v1389 = vsel %vm1385, %v1356, %v869
      %v1390 = vsel %vm1385, %v1357, %v871
      %v1391 = vsel %vm1385, %v1358, %v873
      %v1392 = vsel %vm1385, %v1359, %v875
      %v1393 = vsel %vm1385, %v1360, %v877
      %v1394 = vsel %vm1385, %v1361, %v879
      %v1395 = vsel %vm1385, %v1362, %v881
      %v1396 = vsel %vm1385, %v1363, %v883
      %v1397 = vsel %vm1385, %v1364, %v885
      %v1398 = vsel %vm1385, %v1365, %v887
      %v1399 = vsel %vm1385, %v1366, %v889
      %v1400 = vsel %vm1385, %v1367, %v891
      %v1401 = vsel %vm1385, %v1368, %v893
      %v1402 = vsel %vm1385, %v1369, %v895
      %v1403 = vsel %vm1385, %v1370, %v897
      %v1404 = vsel %vm1385, %v1371, %v899
      %v1405 = vsel %vm1385, %v1372, %v901
      %v1406 = vsel %vm1385, %v1373, %v903
      %v1407 = vsel %vm1385, %v1374, %v905
      %v1408 = vsel %vm1385, %v1375, %v907
      %v1409 = vsel %vm1385, %v1376, %v909
      %v1410 = vsel %vm1385, %v1377, %v911
      %v1411 = vsel %vm1385, %v1378, %v913
      %v1412 = vsel %vm1385, %v1379, %v915
      %v1413 = vsel %vm1385, %v1380, %v917
      %v1414 = vsel %vm1385, %v1381, %v919
      %v1415 = vsel %vm1385, %v1382, %v921
      %v1416 = vsel %vm1385, %v1383, %v923
      %v1417 = vsel %vm1385, %v1384, %v923
      %vm1418 = vcmask 195584
      %v1419 = vsel %vm1418, %v1386, %v971
      %v1420 = vsel %vm1418, %v1387, %v971
      %v1421 = vsel %vm1418, %v1388, %v973
      %v1422 = vsel %vm1418, %v1389, %v975
      %v1423 = vsel %vm1418, %v1390, %v977
      %v1424 = vsel %vm1418, %v1391, %v979
      %v1425 = vsel %vm1418, %v1392, %v981
      %v1426 = vsel %vm1418, %v1393, %v983
      %v1427 = vsel %vm1418, %v1394, %v985
      %v1428 = vsel %vm1418, %v1395, %v987
      %v1429 = vsel %vm1418, %v1396, %v989
      %v1430 = vsel %vm1418, %v1397, %v991
      %v1431 = vsel %vm1418, %v1398, %v993
      %v1432 = vsel %vm1418, %v1399, %v995
      %v1433 = vsel %vm1418, %v1400, %v997
      %v1434 = vsel %vm1418, %v1401, %v999
      %v1435 = vsel %vm1418, %v1402, %v1001
      %v1436 = vsel %vm1418, %v1403, %v1003
      %v1437 = vsel %vm1418, %v1404, %v1005
      %v1438 = vsel %vm1418, %v1405, %v1007
      %v1439 = vsel %vm1418, %v1406, %v1009
      %v1440 = vsel %vm1418, %v1407, %v1011
      %v1441 = vsel %vm1418, %v1408, %v1013
      %v1442 = vsel %vm1418, %v1409, %v1015
      %v1443 = vsel %vm1418, %v1410, %v1017
      %v1444 = vsel %vm1418, %v1411, %v1019
      %v1445 = vsel %vm1418, %v1412, %v1021
      %v1446 = vsel %vm1418, %v1413, %v1023
      %v1447 = vsel %vm1418, %v1414, %v1025
      %v1448 = vsel %vm1418, %v1415, %v1027
      %v1449 = vsel %vm1418, %v1416, %v1029
      %v1450 = vsel %vm1418, %v1417, %v1031
      %vm1451 = vcmask 228352
      %v1452 = vsel %vm1451, %v1419, %v1065
      %v1453 = vsel %vm1451, %v1420, %v1067
      %v1454 = vsel %vm1451, %v1421, %v1069
      %v1455 = vsel %vm1451, %v1422, %v1071
      %v1456 = vsel %vm1451, %v1423, %v1073
      %v1457 = vsel %vm1451, %v1424, %v1075
      %v1458 = vsel %vm1451, %v1425, %v1077
      %v1459 = vsel %vm1451, %v1426, %v1079
      %v1460 = vsel %vm1451, %v1427, %v1081
      %v1461 = vsel %vm1451, %v1428, %v1083
      %v1462 = vsel %vm1451, %v1429, %v1085
      %v1463 = vsel %vm1451, %v1430, %v1087
      %v1464 = vsel %vm1451, %v1431, %v1089
      %v1465 = vsel %vm1451, %v1432, %v1091
      %v1466 = vsel %vm1451, %v1433, %v1093
      %v1467 = vsel %vm1451, %v1434, %v1095
      %v1468 = vsel %vm1451, %v1435, %v1097
      %v1469 = vsel %vm1451, %v1436, %v1099
      %v1470 = vsel %vm1451, %v1437, %v1101
      %v1471 = vsel %vm1451, %v1438, %v1103
      %v1472 = vsel %vm1451, %v1439, %v1105
      %v1473 = vsel %vm1451, %v1440, %v1107
      %v1474 = vsel %vm1451, %v1441, %v1109
      %v1475 = vsel %vm1451, %v1442, %v1111
      %v1476 = vsel %vm1451, %v1443, %v1113
      %v1477 = vsel %vm1451, %v1444, %v1115
      %v1478 = vsel %vm1451, %v1445, %v1117
      %v1479 = vsel %vm1451, %v1446, %v1119
      %v1480 = vsel %vm1451, %v1447, %v1121
      %v1481 = vsel %vm1451, %v1448, %v1123
      %v1482 = vsel %vm1451, %v1449, %v1125
      %v1483 = vsel %vm1451, %v1450, %v1127
      %vm1484 = vcmask 261120
      %v1485 = vsel %vm1484, %v1452, %v1161
      %v1486 = vsel %vm1484, %v1453, %v1163
      %v1487 = vsel %vm1484, %v1454, %v1165
      %v1488 = vsel %vm1484, %v1455, %v1167
      %v1489 = vsel %vm1484, %v1456, %v1169
      %v1490 = vsel %vm1484, %v1457, %v1171
      %v1491 = vsel %vm1484, %v1458, %v1173
      %v1492 = vsel %vm1484, %v1459, %v1175
      %v1493 = vsel %vm1484, %v1460, %v1177
      %v1494 = vsel %vm1484, %v1461, %v1179
      %v1495 = vsel %vm1484, %v1462, %v1181
      %v1496 = vsel %vm1484, %v1463, %v1183
      %v1497 = vsel %vm1484, %v1464, %v1185
      %v1498 = vsel %vm1484, %v1465, %v1187
      %v1499 = vsel %vm1484, %v1466, %v1189
      %v1500 = vsel %vm1484, %v1467, %v1191
      %v1501 = vsel %vm1484, %v1468, %v1193
      %v1502 = vsel %vm1484, %v1469, %v1195
      %v1503 = vsel %vm1484, %v1470, %v1197
      %v1504 = vsel %vm1484, %v1471, %v1199
      %v1505 = vsel %vm1484, %v1472, %v1201
      %v1506 = vsel %vm1484, %v1473, %v1203
      %v1507 = vsel %vm1484, %v1474, %v1205
      %v1508 = vsel %vm1484, %v1475, %v1207
      %v1509 = vsel %vm1484, %v1476, %v1209
      %v1510 = vsel %vm1484, %v1477, %v1211
      %v1511 = vsel %vm1484, %v1478, %v1213
      %v1512 = vsel %vm1484, %v1479, %v1215
      %v1513 = vsel %vm1484, %v1480, %v1217
      %v1514 = vsel %vm1484, %v1481, %v1219
      %v1515 = vsel %vm1484, %v1482, %v1221
      %v1516 = vsel %vm1484, %v1483, %v1221
      %v1517 = vpack.c.bf16 %v1486, %v1485
      %v1518 = vpack.c.bf16 %v1488, %v1487
      %v1519 = vpack.c.bf16 %v1490, %v1489
      %v1520 = vpack.c.bf16 %v1492, %v1491
      %v1521 = vpack.c.bf16 %v1494, %v1493
      %v1522 = vpack.c.bf16 %v1496, %v1495
      %v1523 = vpack.c.bf16 %v1498, %v1497
      %v1524 = vpack.c.bf16 %v1500, %v1499
      %v1525 = vpack.c.bf16 %v1502, %v1501
      %v1526 = vpack.c.bf16 %v1504, %v1503
      %v1527 = vpack.c.bf16 %v1506, %v1505
      %v1528 = vpack.c.bf16 %v1508, %v1507
      %v1529 = vpack.c.bf16 %v1510, %v1509
      %v1530 = vpack.c.bf16 %v1512, %v1511
      %v1531 = vpack.c.bf16 %v1514, %v1513
      %v1532 = vpack.c.bf16 %v1516, %v1515
      %v1533 = vld [vmem:[%s1] sm:$0xf]
      %v1534 = vld [vmem:[%s1 + $0x4] sm:$0xf]
      %v1535 = vld [vmem:[%s1 + $0x8] sm:$0xf]
      %v1536 = vld [vmem:[%s1 + $0xc] sm:$0xf]
      %v1537 = vld [vmem:[%s1 + $0x10] sm:$0x3]
      %v1538 = vld [vmem:[%s2] sm:$0x1]
      %v1540 = vperm.slane %v1538, 0
      %v1547 = vunpack.c.l.b16 %v1533
      %v1548 = vunpack.c.l.b16 %v1534
      %v1549 = vunpack.c.l.b16 %v1535
      %v1550 = vunpack.c.l.b16 %v1536
      %v1551 = vunpack.c.l.b16 %v1537
      %v1552 = vpack.c.b16 %v1548, %v1547
      %v1553 = vpack.c.b16 %v1550, %v1549
      %v1554 = vpack.c.b16 %v1551, %v1551
      %vm1557 = vcmask 293888
      %v1559 = vsel %vm1557, %v1517, 0
      %v1562 = vsel %vm1557, %v1518, 0
      %v1565 = vsel %vm1557, %v1519, 0
      %v1568 = vsel %vm1557, %v1520, 0
      %v1571 = vsel %vm1557, %v1521, 0
      %v1574 = vsel %vm1557, %v1522, 0
      %v1577 = vsel %vm1557, %v1523, 0
      %v1580 = vsel %vm1557, %v1524, 0
      %v1583 = vsel %vm1557, %v1525, 0
      %v1586 = vsel %vm1557, %v1526, 0
      %v1589 = vsel %vm1557, %v1527, 0
      %v1592 = vsel %vm1557, %v1528, 0
      %v1595 = vsel %vm1557, %v1529, 0
      %v1598 = vsel %vm1557, %v1530, 0
      %v1601 = vsel %vm1557, %v1531, 0
      %v1604 = vsel %vm1557, %v1532, 0
      %vm1606 = vcmask 1041408
      %v1608 = vsel %vm1606, %v1554, 0
      %1610 = vmatpush.bf16.msra.mxu0 0
      %1611 = vmatpush.bf16.msra.mxu0 0
      %1612 = vmatpush.bf16.msra.mxu0 0
      %1613 = vmatpush.bf16.msra.mxu0 0
      %1614 = vmatpush.bf16.msra.mxu0 0
      %1615 = vmatpush.bf16.msra.mxu0 %v1608
      %1616 = vmatpush.bf16.msra.mxu0 %v1553
      %1617 = vmatpush.bf16.msra.mxu0 %v1552
      %1618 = vmatmul.bf16.gmra.mxu0 %v1559
      %v1619 = vpop.f32.mrf.mxu0
      %v1620 = vadd.f32 %v1540, %v1619
      %v1621 = vpop.f32.mrf.mxu0
      %v1622 = vadd.f32 %v1540, %v1621
      %1623 = vmatmul.bf16.gmra.mxu0 %v1562
      %v1624 = vpop.f32.mrf.mxu0
      %v1625 = vadd.f32 %v1540, %v1624
      %v1626 = vpop.f32.mrf.mxu0
      %v1627 = vadd.f32 %v1540, %v1626
      %1628 = vmatmul.bf16.gmra.mxu0 %v1565
      %v1629 = vpop.f32.mrf.mxu0
      %v1630 = vadd.f32 %v1540, %v1629
      %v1631 = vpop.f32.mrf.mxu0
      %v1632 = vadd.f32 %v1540, %v1631
      %1633 = vmatmul.bf16.gmra.mxu0 %v1568
      %v1634 = vpop.f32.mrf.mxu0
      %v1635 = vadd.f32 %v1540, %v1634
      %v1636 = vpop.f32.mrf.mxu0
      %v1637 = vadd.f32 %v1540, %v1636
      %1638 = vmatmul.bf16.gmra.mxu0 %v1571
      %v1639 = vpop.f32.mrf.mxu0
      %v1640 = vadd.f32 %v1540, %v1639
      %v1641 = vpop.f32.mrf.mxu0
      %v1642 = vadd.f32 %v1540, %v1641
      %1643 = vmatmul.bf16.gmra.mxu0 %v1574
      %v1644 = vpop.f32.mrf.mxu0
      %v1645 = vadd.f32 %v1540, %v1644
      %v1646 = vpop.f32.mrf.mxu0
      %v1647 = vadd.f32 %v1540, %v1646
      %1648 = vmatmul.bf16.gmra.mxu0 %v1577
      %v1649 = vpop.f32.mrf.mxu0
      %v1650 = vadd.f32 %v1540, %v1649
      %v1651 = vpop.f32.mrf.mxu0
      %v1652 = vadd.f32 %v1540, %v1651
      %1653 = vmatmul.bf16.gmra.mxu0 %v1580
      %v1654 = vpop.f32.mrf.mxu0
      %v1655 = vadd.f32 %v1540, %v1654
      %v1656 = vpop.f32.mrf.mxu0
      %v1657 = vadd.f32 %v1540, %v1656
      %1658 = vmatmul.bf16.gmra.mxu0 %v1583
      %v1659 = vpop.f32.mrf.mxu0
      %v1660 = vadd.f32 %v1540, %v1659
      %v1661 = vpop.f32.mrf.mxu0
      %v1662 = vadd.f32 %v1540, %v1661
      %1663 = vmatmul.bf16.gmra.mxu0 %v1586
      %v1664 = vpop.f32.mrf.mxu0
      %v1665 = vadd.f32 %v1540, %v1664
      %v1666 = vpop.f32.mrf.mxu0
      %v1667 = vadd.f32 %v1540, %v1666
      %1668 = vmatmul.bf16.gmra.mxu0 %v1589
      %v1669 = vpop.f32.mrf.mxu0
      %v1670 = vadd.f32 %v1540, %v1669
      %v1671 = vpop.f32.mrf.mxu0
      %v1672 = vadd.f32 %v1540, %v1671
      %1673 = vmatmul.bf16.gmra.mxu0 %v1592
      %v1674 = vpop.f32.mrf.mxu0
      %v1675 = vadd.f32 %v1540, %v1674
      %v1676 = vpop.f32.mrf.mxu0
      %v1677 = vadd.f32 %v1540, %v1676
      %1678 = vmatmul.bf16.gmra.mxu0 %v1595
      %v1679 = vpop.f32.mrf.mxu0
      %v1680 = vadd.f32 %v1540, %v1679
      %v1681 = vpop.f32.mrf.mxu0
      %v1682 = vadd.f32 %v1540, %v1681
      %1683 = vmatmul.bf16.gmra.mxu0 %v1598
      %v1684 = vpop.f32.mrf.mxu0
      %v1685 = vadd.f32 %v1540, %v1684
      %v1686 = vpop.f32.mrf.mxu0
      %v1687 = vadd.f32 %v1540, %v1686
      %1688 = vmatmul.bf16.gmra.mxu0 %v1601
      %v1689 = vpop.f32.mrf.mxu0
      %v1690 = vadd.f32 %v1540, %v1689
      %v1691 = vpop.f32.mrf.mxu0
      %v1692 = vadd.f32 %v1540, %v1691
      %1693 = vmatmul.bf16.gmra.mxu0 %v1604
      %v1694 = vpop.f32.mrf.mxu0
      %v1695 = vadd.f32 %v1540, %v1694
      %v1696 = vpop.f32.mrf.mxu0
      %v1697 = vadd.f32 %v1540, %v1696
      %1698 = vdwg.mxu0
      %v1699 = vmax.f32 %v1620, 0.0
      %v1700 = vmax.f32 %v1622, 0.0
      %v1701 = vmax.f32 %v1625, 0.0
      %v1702 = vmax.f32 %v1627, 0.0
      %v1703 = vmax.f32 %v1630, 0.0
      %v1704 = vmax.f32 %v1632, 0.0
      %v1705 = vmax.f32 %v1635, 0.0
      %v1706 = vmax.f32 %v1637, 0.0
      %v1707 = vmax.f32 %v1640, 0.0
      %v1708 = vmax.f32 %v1642, 0.0
      %v1709 = vmax.f32 %v1645, 0.0
      %v1710 = vmax.f32 %v1647, 0.0
      %v1711 = vmax.f32 %v1650, 0.0
      %v1712 = vmax.f32 %v1652, 0.0
      %v1713 = vmax.f32 %v1655, 0.0
      %v1714 = vmax.f32 %v1657, 0.0
      %v1715 = vmax.f32 %v1660, 0.0
      %v1716 = vmax.f32 %v1662, 0.0
      %v1717 = vmax.f32 %v1665, 0.0
      %v1718 = vmax.f32 %v1667, 0.0
      %v1719 = vmax.f32 %v1670, 0.0
      %v1720 = vmax.f32 %v1672, 0.0
      %v1721 = vmax.f32 %v1675, 0.0
      %v1722 = vmax.f32 %v1677, 0.0
      %v1723 = vmax.f32 %v1680, 0.0
      %v1724 = vmax.f32 %v1682, 0.0
      %v1725 = vmax.f32 %v1685, 0.0
      %v1726 = vmax.f32 %v1687, 0.0
      %v1727 = vmax.f32 %v1690, 0.0
      %v1728 = vmax.f32 %v1692, 0.0
      %v1729 = vmax.f32 %v1695, 0.0
      %v1730 = vmax.f32 %v1697, 0.0
      %v1763 = vrot.slane %v1699, 7
      %v1764 = vrot.slane %v1700, 7
      %v1765 = vsel %vm290, %v1763, %v1764
      %v1766 = vrot.slane %v1701, 7
      %v1767 = vrot.slane %v1702, 7
      %v1768 = vsel %vm290, %v1766, %v1767
      %v1769 = vrot.slane %v1703, 7
      %v1770 = vrot.slane %v1704, 7
      %v1771 = vsel %vm290, %v1769, %v1770
      %v1772 = vrot.slane %v1705, 7
      %v1773 = vrot.slane %v1706, 7
      %v1774 = vsel %vm290, %v1772, %v1773
      %v1775 = vrot.slane %v1707, 7
      %v1776 = vrot.slane %v1708, 7
      %v1777 = vsel %vm290, %v1775, %v1776
      %v1778 = vrot.slane %v1709, 7
      %v1779 = vrot.slane %v1710, 7
      %v1780 = vsel %vm290, %v1778, %v1779
      %v1781 = vrot.slane %v1711, 7
      %v1782 = vrot.slane %v1712, 7
      %v1783 = vsel %vm290, %v1781, %v1782
      %v1784 = vrot.slane %v1713, 7
      %v1785 = vrot.slane %v1714, 7
      %v1786 = vsel %vm290, %v1784, %v1785
      %v1787 = vrot.slane %v1715, 7
      %v1788 = vrot.slane %v1716, 7
      %v1789 = vsel %vm290, %v1787, %v1788
      %v1790 = vrot.slane %v1717, 7
      %v1791 = vrot.slane %v1718, 7
      %v1792 = vsel %vm290, %v1790, %v1791
      %v1793 = vrot.slane %v1719, 7
      %v1794 = vrot.slane %v1720, 7
      %v1795 = vsel %vm290, %v1793, %v1794
      %v1796 = vrot.slane %v1721, 7
      %v1797 = vrot.slane %v1722, 7
      %v1798 = vsel %vm290, %v1796, %v1797
      %v1799 = vrot.slane %v1723, 7
      %v1800 = vrot.slane %v1724, 7
      %v1801 = vsel %vm290, %v1799, %v1800
      %v1802 = vrot.slane %v1725, 7
      %v1803 = vrot.slane %v1726, 7
      %v1804 = vsel %vm290, %v1802, %v1803
      %v1805 = vrot.slane %v1727, 7
      %v1806 = vrot.slane %v1728, 7
      %v1807 = vsel %vm290, %v1805, %v1806
      %v1808 = vrot.slane %v1729, 7
      %v1809 = vrot.slane %v1730, 7
      %v1810 = vsel %vm290, %v1808, %v1809
      %v1842 = vsel %vm290, 0.0, %v1763
      %v1843 = vsel %vm290, 0.0, %v1766
      %v1844 = vsel %vm290, 0.0, %v1769
      %v1845 = vsel %vm290, 0.0, %v1772
      %v1846 = vsel %vm290, 0.0, %v1775
      %v1847 = vsel %vm290, 0.0, %v1778
      %v1848 = vsel %vm290, 0.0, %v1781
      %v1849 = vsel %vm290, 0.0, %v1784
      %v1850 = vsel %vm290, 0.0, %v1787
      %v1851 = vsel %vm290, 0.0, %v1790
      %v1852 = vsel %vm290, 0.0, %v1793
      %v1853 = vsel %vm290, 0.0, %v1796
      %v1854 = vsel %vm290, 0.0, %v1799
      %v1855 = vsel %vm290, 0.0, %v1802
      %v1856 = vsel %vm290, 0.0, %v1805
      %v1857 = vsel %vm290, 0.0, %v1808
      %v1858 = vrot.slane %v1699, 1
      %v1859 = vrot.slane %v1700, 1
      %v1860 = vsel %vm386, %v1858, %v1859
      %v1861 = vrot.slane %v1701, 1
      %v1862 = vrot.slane %v1702, 1
      %v1863 = vsel %vm386, %v1861, %v1862
      %v1864 = vrot.slane %v1703, 1
      %v1865 = vrot.slane %v1704, 1
      %v1866 = vsel %vm386, %v1864, %v1865
      %v1867 = vrot.slane %v1705, 1
      %v1868 = vrot.slane %v1706, 1
      %v1869 = vsel %vm386, %v1867, %v1868
      %v1870 = vrot.slane %v1707, 1
      %v1871 = vrot.slane %v1708, 1
      %v1872 = vsel %vm386, %v1870, %v1871
      %v1873 = vrot.slane %v1709, 1
      %v1874 = vrot.slane %v1710, 1
      %v1875 = vsel %vm386, %v1873, %v1874
      %v1876 = vrot.slane %v1711, 1
      %v1877 = vrot.slane %v1712, 1
      %v1878 = vsel %vm386, %v1876, %v1877
      %v1879 = vrot.slane %v1713, 1
      %v1880 = vrot.slane %v1714, 1
      %v1881 = vsel %vm386, %v1879, %v1880
      %v1882 = vrot.slane %v1715, 1
      %v1883 = vrot.slane %v1716, 1
      %v1884 = vsel %vm386, %v1882, %v1883
      %v1885 = vrot.slane %v1717, 1
      %v1886 = vrot.slane %v1718, 1
      %v1887 = vsel %vm386, %v1885, %v1886
      %v1888 = vrot.slane %v1719, 1
      %v1889 = vrot.slane %v1720, 1
      %v1890 = vsel %vm386, %v1888, %v1889
      %v1891 = vrot.slane %v1721, 1
      %v1892 = vrot.slane %v1722, 1
      %v1893 = vsel %vm386, %v1891, %v1892
      %v1894 = vrot.slane %v1723, 1
      %v1895 = vrot.slane %v1724, 1
      %v1896 = vsel %vm386, %v1894, %v1895
      %v1897 = vrot.slane %v1725, 1
      %v1898 = vrot.slane %v1726, 1
      %v1899 = vsel %vm386, %v1897, %v1898
      %v1900 = vrot.slane %v1727, 1
      %v1901 = vrot.slane %v1728, 1
      %v1902 = vsel %vm386, %v1900, %v1901
      %v1903 = vrot.slane %v1729, 1
      %v1904 = vrot.slane %v1730, 1
      %v1905 = vsel %vm386, %v1903, %v1904
      %v1922 = vsel %vm386, %v1859, 0.0
      %v1923 = vsel %vm386, %v1862, 0.0
      %v1924 = vsel %vm386, %v1865, 0.0
      %v1925 = vsel %vm386, %v1868, 0.0
      %v1926 = vsel %vm386, %v1871, 0.0
      %v1927 = vsel %vm386, %v1874, 0.0
      %v1928 = vsel %vm386, %v1877, 0.0
      %v1929 = vsel %vm386, %v1880, 0.0
      %v1930 = vsel %vm386, %v1883, 0.0
      %v1931 = vsel %vm386, %v1886, 0.0
      %v1932 = vsel %vm386, %v1889, 0.0
      %v1933 = vsel %vm386, %v1892, 0.0
      %v1934 = vsel %vm386, %v1895, 0.0
      %v1935 = vsel %vm386, %v1898, 0.0
      %v1936 = vsel %vm386, %v1901, 0.0
      %v1937 = vsel %vm386, %v1904, 0.0
      %1954 = vrot.lane.b32.xlu0 %v1842, 8
      %v1955 = vpop.permute.xlu0 %1954
      %1956 = vrot.lane.b32.xlu0 %v1765, 8
      %v1957 = vpop.permute.xlu0 %1956
      %1958 = vrot.lane.b32.xlu0 %v1843, 8
      %v1959 = vpop.permute.xlu0 %1958
      %1960 = vrot.lane.b32.xlu0 %v1768, 8
      %v1961 = vpop.permute.xlu0 %1960
      %1962 = vrot.lane.b32.xlu0 %v1844, 8
      %v1963 = vpop.permute.xlu0 %1962
      %1964 = vrot.lane.b32.xlu0 %v1771, 8
      %v1965 = vpop.permute.xlu0 %1964
      %1966 = vrot.lane.b32.xlu0 %v1845, 8
      %v1967 = vpop.permute.xlu0 %1966
      %1968 = vrot.lane.b32.xlu0 %v1774, 8
      %v1969 = vpop.permute.xlu0 %1968
      %1970 = vrot.lane.b32.xlu0 %v1846, 8
      %v1971 = vpop.permute.xlu0 %1970
      %1972 = vrot.lane.b32.xlu0 %v1777, 8
      %v1973 = vpop.permute.xlu0 %1972
      %1974 = vrot.lane.b32.xlu0 %v1847, 8
      %v1975 = vpop.permute.xlu0 %1974
      %1976 = vrot.lane.b32.xlu0 %v1780, 8
      %v1977 = vpop.permute.xlu0 %1976
      %1978 = vrot.lane.b32.xlu0 %v1848, 8
      %v1979 = vpop.permute.xlu0 %1978
      %1980 = vrot.lane.b32.xlu0 %v1783, 8
      %v1981 = vpop.permute.xlu0 %1980
      %1982 = vrot.lane.b32.xlu0 %v1849, 8
      %v1983 = vpop.permute.xlu0 %1982
      %1984 = vrot.lane.b32.xlu0 %v1786, 8
      %v1985 = vpop.permute.xlu0 %1984
      %1986 = vrot.lane.b32.xlu0 %v1850, 8
      %v1987 = vpop.permute.xlu0 %1986
      %1988 = vrot.lane.b32.xlu0 %v1789, 8
      %v1989 = vpop.permute.xlu0 %1988
      %1990 = vrot.lane.b32.xlu0 %v1851, 8
      %v1991 = vpop.permute.xlu0 %1990
      %1992 = vrot.lane.b32.xlu0 %v1792, 8
      %v1993 = vpop.permute.xlu0 %1992
      %1994 = vrot.lane.b32.xlu0 %v1852, 8
      %v1995 = vpop.permute.xlu0 %1994
      %1996 = vrot.lane.b32.xlu0 %v1795, 8
      %v1997 = vpop.permute.xlu0 %1996
      %1998 = vrot.lane.b32.xlu0 %v1853, 8
      %v1999 = vpop.permute.xlu0 %1998
      %2000 = vrot.lane.b32.xlu0 %v1798, 8
      %v2001 = vpop.permute.xlu0 %2000
      %2002 = vrot.lane.b32.xlu0 %v1854, 8
      %v2003 = vpop.permute.xlu0 %2002
      %2004 = vrot.lane.b32.xlu0 %v1801, 8
      %v2005 = vpop.permute.xlu0 %2004
      %2006 = vrot.lane.b32.xlu0 %v1855, 8
      %v2007 = vpop.permute.xlu0 %2006
      %2008 = vrot.lane.b32.xlu0 %v1804, 8
      %v2009 = vpop.permute.xlu0 %2008
      %2010 = vrot.lane.b32.xlu0 %v1856, 8
      %v2011 = vpop.permute.xlu0 %2010
      %2012 = vrot.lane.b32.xlu0 %v1807, 8
      %v2013 = vpop.permute.xlu0 %2012
      %2014 = vrot.lane.b32.xlu0 %v1857, 8
      %v2015 = vpop.permute.xlu0 %2014
      %2016 = vrot.lane.b32.xlu0 %v1810, 8
      %v2017 = vpop.permute.xlu0 %2016
      %2050 = vrot.lane.b32.xlu0 %v1843, 16
      %v2051 = vpop.permute.xlu0 %2050
      %2052 = vrot.lane.b32.xlu0 %v1768, 16
      %v2053 = vpop.permute.xlu0 %2052
      %2054 = vrot.lane.b32.xlu0 %v1844, 16
      %v2055 = vpop.permute.xlu0 %2054
      %2056 = vrot.lane.b32.xlu0 %v1771, 16
      %v2057 = vpop.permute.xlu0 %2056
      %2058 = vrot.lane.b32.xlu0 %v1845, 16
      %v2059 = vpop.permute.xlu0 %2058
      %2060 = vrot.lane.b32.xlu0 %v1774, 16
      %v2061 = vpop.permute.xlu0 %2060
      %2062 = vrot.lane.b32.xlu0 %v1846, 16
      %v2063 = vpop.permute.xlu0 %2062
      %2064 = vrot.lane.b32.xlu0 %v1777, 16
      %v2065 = vpop.permute.xlu0 %2064
      %2066 = vrot.lane.b32.xlu0 %v1847, 16
      %v2067 = vpop.permute.xlu0 %2066
      %2068 = vrot.lane.b32.xlu0 %v1780, 16
      %v2069 = vpop.permute.xlu0 %2068
      %2070 = vrot.lane.b32.xlu0 %v1848, 16
      %v2071 = vpop.permute.xlu0 %2070
      %2072 = vrot.lane.b32.xlu0 %v1783, 16
      %v2073 = vpop.permute.xlu0 %2072
      %2074 = vrot.lane.b32.xlu0 %v1849, 16
      %v2075 = vpop.permute.xlu0 %2074
      %2076 = vrot.lane.b32.xlu0 %v1786, 16
      %v2077 = vpop.permute.xlu0 %2076
      %2078 = vrot.lane.b32.xlu0 %v1850, 16
      %v2079 = vpop.permute.xlu0 %2078
      %2080 = vrot.lane.b32.xlu0 %v1789, 16
      %v2081 = vpop.permute.xlu0 %2080
      %2082 = vrot.lane.b32.xlu0 %v1851, 16
      %v2083 = vpop.permute.xlu0 %2082
      %2084 = vrot.lane.b32.xlu0 %v1792, 16
      %v2085 = vpop.permute.xlu0 %2084
      %2086 = vrot.lane.b32.xlu0 %v1852, 16
      %v2087 = vpop.permute.xlu0 %2086
      %2088 = vrot.lane.b32.xlu0 %v1795, 16
      %v2089 = vpop.permute.xlu0 %2088
      %2090 = vrot.lane.b32.xlu0 %v1853, 16
      %v2091 = vpop.permute.xlu0 %2090
      %2092 = vrot.lane.b32.xlu0 %v1798, 16
      %v2093 = vpop.permute.xlu0 %2092
      %2094 = vrot.lane.b32.xlu0 %v1854, 16
      %v2095 = vpop.permute.xlu0 %2094
      %2096 = vrot.lane.b32.xlu0 %v1801, 16
      %v2097 = vpop.permute.xlu0 %2096
      %2098 = vrot.lane.b32.xlu0 %v1855, 16
      %v2099 = vpop.permute.xlu0 %2098
      %2100 = vrot.lane.b32.xlu0 %v1804, 16
      %v2101 = vpop.permute.xlu0 %2100
      %2102 = vrot.lane.b32.xlu0 %v1856, 16
      %v2103 = vpop.permute.xlu0 %2102
      %2104 = vrot.lane.b32.xlu0 %v1807, 16
      %v2105 = vpop.permute.xlu0 %2104
      %2106 = vrot.lane.b32.xlu0 %v1857, 16
      %v2107 = vpop.permute.xlu0 %2106
      %2108 = vrot.lane.b32.xlu0 %v1810, 16
      %v2109 = vpop.permute.xlu0 %2108
      %2110 = vrot.lane.b32.xlu0 0.0, 16
      %v2111 = vpop.permute.xlu0 %2110
      %2143 = vrot.lane.b32.xlu0 %v1699, 24
      %v2144 = vpop.permute.xlu0 %2143
      %2145 = vrot.lane.b32.xlu0 %v1700, 24
      %v2146 = vpop.permute.xlu0 %2145
      %2147 = vrot.lane.b32.xlu0 %v1701, 24
      %v2148 = vpop.permute.xlu0 %2147
      %2149 = vrot.lane.b32.xlu0 %v1702, 24
      %v2150 = vpop.permute.xlu0 %2149
      %2151 = vrot.lane.b32.xlu0 %v1703, 24
      %v2152 = vpop.permute.xlu0 %2151
      %2153 = vrot.lane.b32.xlu0 %v1704, 24
      %v2154 = vpop.permute.xlu0 %2153
      %2155 = vrot.lane.b32.xlu0 %v1705, 24
      %v2156 = vpop.permute.xlu0 %2155
      %2157 = vrot.lane.b32.xlu0 %v1706, 24
      %v2158 = vpop.permute.xlu0 %2157
      %2159 = vrot.lane.b32.xlu0 %v1707, 24
      %v2160 = vpop.permute.xlu0 %2159
      %2161 = vrot.lane.b32.xlu0 %v1708, 24
      %v2162 = vpop.permute.xlu0 %2161
      %2163 = vrot.lane.b32.xlu0 %v1709, 24
      %v2164 = vpop.permute.xlu0 %2163
      %2165 = vrot.lane.b32.xlu0 %v1710, 24
      %v2166 = vpop.permute.xlu0 %2165
      %2167 = vrot.lane.b32.xlu0 %v1711, 24
      %v2168 = vpop.permute.xlu0 %2167
      %2169 = vrot.lane.b32.xlu0 %v1712, 24
      %v2170 = vpop.permute.xlu0 %2169
      %2171 = vrot.lane.b32.xlu0 %v1713, 24
      %v2172 = vpop.permute.xlu0 %2171
      %2173 = vrot.lane.b32.xlu0 %v1714, 24
      %v2174 = vpop.permute.xlu0 %2173
      %2175 = vrot.lane.b32.xlu0 %v1715, 24
      %v2176 = vpop.permute.xlu0 %2175
      %2177 = vrot.lane.b32.xlu0 %v1716, 24
      %v2178 = vpop.permute.xlu0 %2177
      %2179 = vrot.lane.b32.xlu0 %v1717, 24
      %v2180 = vpop.permute.xlu0 %2179
      %2181 = vrot.lane.b32.xlu0 %v1718, 24
      %v2182 = vpop.permute.xlu0 %2181
      %2183 = vrot.lane.b32.xlu0 %v1719, 24
      %v2184 = vpop.permute.xlu0 %2183
      %2185 = vrot.lane.b32.xlu0 %v1720, 24
      %v2186 = vpop.permute.xlu0 %2185
      %2187 = vrot.lane.b32.xlu0 %v1721, 24
      %v2188 = vpop.permute.xlu0 %2187
      %2189 = vrot.lane.b32.xlu0 %v1722, 24
      %v2190 = vpop.permute.xlu0 %2189
      %2191 = vrot.lane.b32.xlu0 %v1723, 24
      %v2192 = vpop.permute.xlu0 %2191
      %2193 = vrot.lane.b32.xlu0 %v1724, 24
      %v2194 = vpop.permute.xlu0 %2193
      %2195 = vrot.lane.b32.xlu0 %v1725, 24
      %v2196 = vpop.permute.xlu0 %2195
      %2197 = vrot.lane.b32.xlu0 %v1726, 24
      %v2198 = vpop.permute.xlu0 %2197
      %2199 = vrot.lane.b32.xlu0 %v1727, 24
      %v2200 = vpop.permute.xlu0 %2199
      %2201 = vrot.lane.b32.xlu0 %v1728, 24
      %v2202 = vpop.permute.xlu0 %2201
      %2233 = vrot.lane.b32.xlu0 %v1699, 32
      %v2234 = vpop.permute.xlu0 %2233
      %2235 = vrot.lane.b32.xlu0 %v1700, 32
      %v2236 = vpop.permute.xlu0 %2235
      %2237 = vrot.lane.b32.xlu0 %v1701, 32
      %v2238 = vpop.permute.xlu0 %2237
      %2239 = vrot.lane.b32.xlu0 %v1702, 32
      %v2240 = vpop.permute.xlu0 %2239
      %2241 = vrot.lane.b32.xlu0 %v1703, 32
      %v2242 = vpop.permute.xlu0 %2241
      %2243 = vrot.lane.b32.xlu0 %v1704, 32
      %v2244 = vpop.permute.xlu0 %2243
      %2245 = vrot.lane.b32.xlu0 %v1705, 32
      %v2246 = vpop.permute.xlu0 %2245
      %2247 = vrot.lane.b32.xlu0 %v1706, 32
      %v2248 = vpop.permute.xlu0 %2247
      %2249 = vrot.lane.b32.xlu0 %v1707, 32
      %v2250 = vpop.permute.xlu0 %2249
      %2251 = vrot.lane.b32.xlu0 %v1708, 32
      %v2252 = vpop.permute.xlu0 %2251
      %2253 = vrot.lane.b32.xlu0 %v1709, 32
      %v2254 = vpop.permute.xlu0 %2253
      %2255 = vrot.lane.b32.xlu0 %v1710, 32
      %v2256 = vpop.permute.xlu0 %2255
      %2257 = vrot.lane.b32.xlu0 %v1711, 32
      %v2258 = vpop.permute.xlu0 %2257
      %2259 = vrot.lane.b32.xlu0 %v1712, 32
      %v2260 = vpop.permute.xlu0 %2259
      %2261 = vrot.lane.b32.xlu0 %v1713, 32
      %v2262 = vpop.permute.xlu0 %2261
      %2263 = vrot.lane.b32.xlu0 %v1714, 32
      %v2264 = vpop.permute.xlu0 %2263
      %2265 = vrot.lane.b32.xlu0 %v1715, 32
      %v2266 = vpop.permute.xlu0 %2265
      %2267 = vrot.lane.b32.xlu0 %v1716, 32
      %v2268 = vpop.permute.xlu0 %2267
      %2269 = vrot.lane.b32.xlu0 %v1717, 32
      %v2270 = vpop.permute.xlu0 %2269
      %2271 = vrot.lane.b32.xlu0 %v1718, 32
      %v2272 = vpop.permute.xlu0 %2271
      %2273 = vrot.lane.b32.xlu0 %v1719, 32
      %v2274 = vpop.permute.xlu0 %2273
      %2275 = vrot.lane.b32.xlu0 %v1720, 32
      %v2276 = vpop.permute.xlu0 %2275
      %2277 = vrot.lane.b32.xlu0 %v1721, 32
      %v2278 = vpop.permute.xlu0 %2277
      %2279 = vrot.lane.b32.xlu0 %v1722, 32
      %v2280 = vpop.permute.xlu0 %2279
      %2281 = vrot.lane.b32.xlu0 %v1723, 32
      %v2282 = vpop.permute.xlu0 %2281
      %2283 = vrot.lane.b32.xlu0 %v1724, 32
      %v2284 = vpop.permute.xlu0 %2283
      %2285 = vrot.lane.b32.xlu0 %v1725, 32
      %v2286 = vpop.permute.xlu0 %2285
      %2287 = vrot.lane.b32.xlu0 %v1726, 32
      %v2288 = vpop.permute.xlu0 %2287
      %2289 = vrot.lane.b32.xlu0 %v1727, 32
      %v2290 = vpop.permute.xlu0 %2289
      %2291 = vrot.lane.b32.xlu0 %v1728, 32
      %v2292 = vpop.permute.xlu0 %2291
      %2293 = vrot.lane.b32.xlu0 %v1729, 32
      %v2294 = vpop.permute.xlu0 %2293
      %2295 = vrot.lane.b32.xlu0 %v1730, 32
      %v2296 = vpop.permute.xlu0 %2295
      %2329 = vrot.lane.b32.xlu0 %v1701, 40
      %v2330 = vpop.permute.xlu0 %2329
      %2331 = vrot.lane.b32.xlu0 %v1702, 40
      %v2332 = vpop.permute.xlu0 %2331
      %2333 = vrot.lane.b32.xlu0 %v1703, 40
      %v2334 = vpop.permute.xlu0 %2333
      %2335 = vrot.lane.b32.xlu0 %v1704, 40
      %v2336 = vpop.permute.xlu0 %2335
      %2337 = vrot.lane.b32.xlu0 %v1705, 40
      %v2338 = vpop.permute.xlu0 %2337
      %2339 = vrot.lane.b32.xlu0 %v1706, 40
      %v2340 = vpop.permute.xlu0 %2339
      %2341 = vrot.lane.b32.xlu0 %v1707, 40
      %v2342 = vpop.permute.xlu0 %2341
      %2343 = vrot.lane.b32.xlu0 %v1708, 40
      %v2344 = vpop.permute.xlu0 %2343
      %2345 = vrot.lane.b32.xlu0 %v1709, 40
      %v2346 = vpop.permute.xlu0 %2345
      %2347 = vrot.lane.b32.xlu0 %v1710, 40
      %v2348 = vpop.permute.xlu0 %2347
      %2349 = vrot.lane.b32.xlu0 %v1711, 40
      %v2350 = vpop.permute.xlu0 %2349
      %2351 = vrot.lane.b32.xlu0 %v1712, 40
      %v2352 = vpop.permute.xlu0 %2351
      %2353 = vrot.lane.b32.xlu0 %v1713, 40
      %v2354 = vpop.permute.xlu0 %2353
      %2355 = vrot.lane.b32.xlu0 %v1714, 40
      %v2356 = vpop.permute.xlu0 %2355
      %2357 = vrot.lane.b32.xlu0 %v1715, 40
      %v2358 = vpop.permute.xlu0 %2357
      %2359 = vrot.lane.b32.xlu0 %v1716, 40
      %v2360 = vpop.permute.xlu0 %2359
      %2361 = vrot.lane.b32.xlu0 %v1717, 40
      %v2362 = vpop.permute.xlu0 %2361
      %2363 = vrot.lane.b32.xlu0 %v1718, 40
      %v2364 = vpop.permute.xlu0 %2363
      %2365 = vrot.lane.b32.xlu0 %v1719, 40
      %v2366 = vpop.permute.xlu0 %2365
      %2367 = vrot.lane.b32.xlu0 %v1720, 40
      %v2368 = vpop.permute.xlu0 %2367
      %2369 = vrot.lane.b32.xlu0 %v1721, 40
      %v2370 = vpop.permute.xlu0 %2369
      %2371 = vrot.lane.b32.xlu0 %v1722, 40
      %v2372 = vpop.permute.xlu0 %2371
      %2373 = vrot.lane.b32.xlu0 %v1723, 40
      %v2374 = vpop.permute.xlu0 %2373
      %2375 = vrot.lane.b32.xlu0 %v1724, 40
      %v2376 = vpop.permute.xlu0 %2375
      %2377 = vrot.lane.b32.xlu0 %v1725, 40
      %v2378 = vpop.permute.xlu0 %2377
      %2379 = vrot.lane.b32.xlu0 %v1726, 40
      %v2380 = vpop.permute.xlu0 %2379
      %2381 = vrot.lane.b32.xlu0 %v1727, 40
      %v2382 = vpop.permute.xlu0 %2381
      %2383 = vrot.lane.b32.xlu0 %v1728, 40
      %v2384 = vpop.permute.xlu0 %2383
      %2385 = vrot.lane.b32.xlu0 %v1729, 40
      %v2386 = vpop.permute.xlu0 %2385
      %2387 = vrot.lane.b32.xlu0 %v1730, 40
      %v2388 = vpop.permute.xlu0 %2387
      %2389 = vrot.lane.b32.xlu0 0.0, 40
      %v2390 = vpop.permute.xlu0 %2389
      %2437 = vrot.lane.b32.xlu0 0.0, 48
      %v2438 = vpop.permute.xlu0 %2437
      %2439 = vrot.lane.b32.xlu0 %v1860, 48
      %v2440 = vpop.permute.xlu0 %2439
      %2441 = vrot.lane.b32.xlu0 %v1922, 48
      %v2442 = vpop.permute.xlu0 %2441
      %2443 = vrot.lane.b32.xlu0 %v1863, 48
      %v2444 = vpop.permute.xlu0 %2443
      %2445 = vrot.lane.b32.xlu0 %v1923, 48
      %v2446 = vpop.permute.xlu0 %2445
      %2447 = vrot.lane.b32.xlu0 %v1866, 48
      %v2448 = vpop.permute.xlu0 %2447
      %2449 = vrot.lane.b32.xlu0 %v1924, 48
      %v2450 = vpop.permute.xlu0 %2449
      %2451 = vrot.lane.b32.xlu0 %v1869, 48
      %v2452 = vpop.permute.xlu0 %2451
      %2453 = vrot.lane.b32.xlu0 %v1925, 48
      %v2454 = vpop.permute.xlu0 %2453
      %2455 = vrot.lane.b32.xlu0 %v1872, 48
      %v2456 = vpop.permute.xlu0 %2455
      %2457 = vrot.lane.b32.xlu0 %v1926, 48
      %v2458 = vpop.permute.xlu0 %2457
      %2459 = vrot.lane.b32.xlu0 %v1875, 48
      %v2460 = vpop.permute.xlu0 %2459
      %2461 = vrot.lane.b32.xlu0 %v1927, 48
      %v2462 = vpop.permute.xlu0 %2461
      %2463 = vrot.lane.b32.xlu0 %v1878, 48
      %v2464 = vpop.permute.xlu0 %2463
      %2465 = vrot.lane.b32.xlu0 %v1928, 48
      %v2466 = vpop.permute.xlu0 %2465
      %2467 = vrot.lane.b32.xlu0 %v1881, 48
      %v2468 = vpop.permute.xlu0 %2467
      %2469 = vrot.lane.b32.xlu0 %v1929, 48
      %v2470 = vpop.permute.xlu0 %2469
      %2471 = vrot.lane.b32.xlu0 %v1884, 48
      %v2472 = vpop.permute.xlu0 %2471
      %2473 = vrot.lane.b32.xlu0 %v1930, 48
      %v2474 = vpop.permute.xlu0 %2473
      %2475 = vrot.lane.b32.xlu0 %v1887, 48
      %v2476 = vpop.permute.xlu0 %2475
      %2477 = vrot.lane.b32.xlu0 %v1931, 48
      %v2478 = vpop.permute.xlu0 %2477
      %2479 = vrot.lane.b32.xlu0 %v1890, 48
      %v2480 = vpop.permute.xlu0 %2479
      %2481 = vrot.lane.b32.xlu0 %v1932, 48
      %v2482 = vpop.permute.xlu0 %2481
      %2483 = vrot.lane.b32.xlu0 %v1893, 48
      %v2484 = vpop.permute.xlu0 %2483
      %2485 = vrot.lane.b32.xlu0 %v1933, 48
      %v2486 = vpop.permute.xlu0 %2485
      %2487 = vrot.lane.b32.xlu0 %v1896, 48
      %v2488 = vpop.permute.xlu0 %2487
      %2489 = vrot.lane.b32.xlu0 %v1934, 48
      %v2490 = vpop.permute.xlu0 %2489
      %2491 = vrot.lane.b32.xlu0 %v1899, 48
      %v2492 = vpop.permute.xlu0 %2491
      %2493 = vrot.lane.b32.xlu0 %v1935, 48
      %v2494 = vpop.permute.xlu0 %2493
      %2495 = vrot.lane.b32.xlu0 %v1902, 48
      %v2496 = vpop.permute.xlu0 %2495
      %2497 = vrot.lane.b32.xlu0 %v1936, 48
      %v2498 = vpop.permute.xlu0 %2497
      %2531 = vrot.lane.b32.xlu0 %v1860, 56
      %v2532 = vpop.permute.xlu0 %2531
      %2533 = vrot.lane.b32.xlu0 %v1922, 56
      %v2534 = vpop.permute.xlu0 %2533
      %2535 = vrot.lane.b32.xlu0 %v1863, 56
      %v2536 = vpop.permute.xlu0 %2535
      %2537 = vrot.lane.b32.xlu0 %v1923, 56
      %v2538 = vpop.permute.xlu0 %2537
      %2539 = vrot.lane.b32.xlu0 %v1866, 56
      %v2540 = vpop.permute.xlu0 %2539
      %2541 = vrot.lane.b32.xlu0 %v1924, 56
      %v2542 = vpop.permute.xlu0 %2541
      %2543 = vrot.lane.b32.xlu0 %v1869, 56
      %v2544 = vpop.permute.xlu0 %2543
      %2545 = vrot.lane.b32.xlu0 %v1925, 56
      %v2546 = vpop.permute.xlu0 %2545
      %2547 = vrot.lane.b32.xlu0 %v1872, 56
      %v2548 = vpop.permute.xlu0 %2547
      %2549 = vrot.lane.b32.xlu0 %v1926, 56
      %v2550 = vpop.permute.xlu0 %2549
      %2551 = vrot.lane.b32.xlu0 %v1875, 56
      %v2552 = vpop.permute.xlu0 %2551
      %2553 = vrot.lane.b32.xlu0 %v1927, 56
      %v2554 = vpop.permute.xlu0 %2553
      %2555 = vrot.lane.b32.xlu0 %v1878, 56
      %v2556 = vpop.permute.xlu0 %2555
      %2557 = vrot.lane.b32.xlu0 %v1928, 56
      %v2558 = vpop.permute.xlu0 %2557
      %2559 = vrot.lane.b32.xlu0 %v1881, 56
      %v2560 = vpop.permute.xlu0 %2559
      %2561 = vrot.lane.b32.xlu0 %v1929, 56
      %v2562 = vpop.permute.xlu0 %2561
      %2563 = vrot.lane.b32.xlu0 %v1884, 56
      %v2564 = vpop.permute.xlu0 %2563
      %2565 = vrot.lane.b32.xlu0 %v1930, 56
      %v2566 = vpop.permute.xlu0 %2565
      %2567 = vrot.lane.b32.xlu0 %v1887, 56
      %v2568 = vpop.permute.xlu0 %2567
      %2569 = vrot.lane.b32.xlu0 %v1931, 56
      %v2570 = vpop.permute.xlu0 %2569
      %2571 = vrot.lane.b32.xlu0 %v1890, 56
      %v2572 = vpop.permute.xlu0 %2571
      %2573 = vrot.lane.b32.xlu0 %v1932, 56
      %v2574 = vpop.permute.xlu0 %2573
      %2575 = vrot.lane.b32.xlu0 %v1893, 56
      %v2576 = vpop.permute.xlu0 %2575
      %2577 = vrot.lane.b32.xlu0 %v1933, 56
      %v2578 = vpop.permute.xlu0 %2577
      %2579 = vrot.lane.b32.xlu0 %v1896, 56
      %v2580 = vpop.permute.xlu0 %2579
      %2581 = vrot.lane.b32.xlu0 %v1934, 56
      %v2582 = vpop.permute.xlu0 %2581
      %2583 = vrot.lane.b32.xlu0 %v1899, 56
      %v2584 = vpop.permute.xlu0 %2583
      %2585 = vrot.lane.b32.xlu0 %v1935, 56
      %v2586 = vpop.permute.xlu0 %2585
      %2587 = vrot.lane.b32.xlu0 %v1902, 56
      %v2588 = vpop.permute.xlu0 %2587
      %2589 = vrot.lane.b32.xlu0 %v1936, 56
      %v2590 = vpop.permute.xlu0 %2589
      %2591 = vrot.lane.b32.xlu0 %v1905, 56
      %v2592 = vpop.permute.xlu0 %2591
      %2593 = vrot.lane.b32.xlu0 %v1937, 56
      %v2594 = vpop.permute.xlu0 %2593
      %2627 = vrot.lane.b32.xlu0 %v1863, 64
      %v2628 = vpop.permute.xlu0 %2627
      %2629 = vrot.lane.b32.xlu0 %v1923, 64
      %v2630 = vpop.permute.xlu0 %2629
      %2631 = vrot.lane.b32.xlu0 %v1866, 64
      %v2632 = vpop.permute.xlu0 %2631
      %2633 = vrot.lane.b32.xlu0 %v1924, 64
      %v2634 = vpop.permute.xlu0 %2633
      %2635 = vrot.lane.b32.xlu0 %v1869, 64
      %v2636 = vpop.permute.xlu0 %2635
      %2637 = vrot.lane.b32.xlu0 %v1925, 64
      %v2638 = vpop.permute.xlu0 %2637
      %2639 = vrot.lane.b32.xlu0 %v1872, 64
      %v2640 = vpop.permute.xlu0 %2639
      %2641 = vrot.lane.b32.xlu0 %v1926, 64
      %v2642 = vpop.permute.xlu0 %2641
      %2643 = vrot.lane.b32.xlu0 %v1875, 64
      %v2644 = vpop.permute.xlu0 %2643
      %2645 = vrot.lane.b32.xlu0 %v1927, 64
      %v2646 = vpop.permute.xlu0 %2645
      %2647 = vrot.lane.b32.xlu0 %v1878, 64
      %v2648 = vpop.permute.xlu0 %2647
      %2649 = vrot.lane.b32.xlu0 %v1928, 64
      %v2650 = vpop.permute.xlu0 %2649
      %2651 = vrot.lane.b32.xlu0 %v1881, 64
      %v2652 = vpop.permute.xlu0 %2651
      %2653 = vrot.lane.b32.xlu0 %v1929, 64
      %v2654 = vpop.permute.xlu0 %2653
      %2655 = vrot.lane.b32.xlu0 %v1884, 64
      %v2656 = vpop.permute.xlu0 %2655
      %2657 = vrot.lane.b32.xlu0 %v1930, 64
      %v2658 = vpop.permute.xlu0 %2657
      %2659 = vrot.lane.b32.xlu0 %v1887, 64
      %v2660 = vpop.permute.xlu0 %2659
      %2661 = vrot.lane.b32.xlu0 %v1931, 64
      %v2662 = vpop.permute.xlu0 %2661
      %2663 = vrot.lane.b32.xlu0 %v1890, 64
      %v2664 = vpop.permute.xlu0 %2663
      %2665 = vrot.lane.b32.xlu0 %v1932, 64
      %v2666 = vpop.permute.xlu0 %2665
      %2667 = vrot.lane.b32.xlu0 %v1893, 64
      %v2668 = vpop.permute.xlu0 %2667
      %2669 = vrot.lane.b32.xlu0 %v1933, 64
      %v2670 = vpop.permute.xlu0 %2669
      %2671 = vrot.lane.b32.xlu0 %v1896, 64
      %v2672 = vpop.permute.xlu0 %2671
      %2673 = vrot.lane.b32.xlu0 %v1934, 64
      %v2674 = vpop.permute.xlu0 %2673
      %2675 = vrot.lane.b32.xlu0 %v1899, 64
      %v2676 = vpop.permute.xlu0 %2675
      %2677 = vrot.lane.b32.xlu0 %v1935, 64
      %v2678 = vpop.permute.xlu0 %2677
      %2679 = vrot.lane.b32.xlu0 %v1902, 64
      %v2680 = vpop.permute.xlu0 %2679
      %2681 = vrot.lane.b32.xlu0 %v1936, 64
      %v2682 = vpop.permute.xlu0 %2681
      %2683 = vrot.lane.b32.xlu0 %v1905, 64
      %v2684 = vpop.permute.xlu0 %2683
      %2685 = vrot.lane.b32.xlu0 %v1937, 64
      %v2686 = vpop.permute.xlu0 %2685
      %2687 = vrot.lane.b32.xlu0 0.0, 64
      %v2688 = vpop.permute.xlu0 %2687
      %v2720 = vsel %vm1286, 0.0, %v1955
      %v2721 = vsel %vm1286, 0.0, %v1957
      %v2722 = vsel %vm1286, %v1842, %v1959
      %v2723 = vsel %vm1286, %v1765, %v1961
      %v2724 = vsel %vm1286, %v1843, %v1963
      %v2725 = vsel %vm1286, %v1768, %v1965
      %v2726 = vsel %vm1286, %v1844, %v1967
      %v2727 = vsel %vm1286, %v1771, %v1969
      %v2728 = vsel %vm1286, %v1845, %v1971
      %v2729 = vsel %vm1286, %v1774, %v1973
      %v2730 = vsel %vm1286, %v1846, %v1975
      %v2731 = vsel %vm1286, %v1777, %v1977
      %v2732 = vsel %vm1286, %v1847, %v1979
      %v2733 = vsel %vm1286, %v1780, %v1981
      %v2734 = vsel %vm1286, %v1848, %v1983
      %v2735 = vsel %vm1286, %v1783, %v1985
      %v2736 = vsel %vm1286, %v1849, %v1987
      %v2737 = vsel %vm1286, %v1786, %v1989
      %v2738 = vsel %vm1286, %v1850, %v1991
      %v2739 = vsel %vm1286, %v1789, %v1993
      %v2740 = vsel %vm1286, %v1851, %v1995
      %v2741 = vsel %vm1286, %v1792, %v1997
      %v2742 = vsel %vm1286, %v1852, %v1999
      %v2743 = vsel %vm1286, %v1795, %v2001
      %v2744 = vsel %vm1286, %v1853, %v2003
      %v2745 = vsel %vm1286, %v1798, %v2005
      %v2746 = vsel %vm1286, %v1854, %v2007
      %v2747 = vsel %vm1286, %v1801, %v2009
      %v2748 = vsel %vm1286, %v1855, %v2011
      %v2749 = vsel %vm1286, %v1804, %v2013
      %v2750 = vsel %vm1286, %v1856, %v2015
      %v2751 = vsel %vm1286, %v1807, %v2017
      %v2752 = vsel %vm1352, %v2720, %v2051
      %v2753 = vsel %vm1352, %v2721, %v2053
      %v2754 = vsel %vm1352, %v2722, %v2055
      %v2755 = vsel %vm1352, %v2723, %v2057
      %v2756 = vsel %vm1352, %v2724, %v2059
      %v2757 = vsel %vm1352, %v2725, %v2061
      %v2758 = vsel %vm1352, %v2726, %v2063
      %v2759 = vsel %vm1352, %v2727, %v2065
      %v2760 = vsel %vm1352, %v2728, %v2067
      %v2761 = vsel %vm1352, %v2729, %v2069
      %v2762 = vsel %vm1352, %v2730, %v2071
      %v2763 = vsel %vm1352, %v2731, %v2073
      %v2764 = vsel %vm1352, %v2732, %v2075
      %v2765 = vsel %vm1352, %v2733, %v2077
      %v2766 = vsel %vm1352, %v2734, %v2079
      %v2767 = vsel %vm1352, %v2735, %v2081
      %v2768 = vsel %vm1352, %v2736, %v2083
      %v2769 = vsel %vm1352, %v2737, %v2085
      %v2770 = vsel %vm1352, %v2738, %v2087
      %v2771 = vsel %vm1352, %v2739, %v2089
      %v2772 = vsel %vm1352, %v2740, %v2091
      %v2773 = vsel %vm1352, %v2741, %v2093
      %v2774 = vsel %vm1352, %v2742, %v2095
      %v2775 = vsel %vm1352, %v2743, %v2097
      %v2776 = vsel %vm1352, %v2744, %v2099
      %v2777 = vsel %vm1352, %v2745, %v2101
      %v2778 = vsel %vm1352, %v2746, %v2103
      %v2779 = vsel %vm1352, %v2747, %v2105
      %v2780 = vsel %vm1352, %v2748, %v2107
      %v2781 = vsel %vm1352, %v2749, %v2109
      %v2782 = vsel %vm1352, %v2750, %v2111
      %v2783 = vsel %vm1352, %v2751, %v2111
      %v2784 = vsel %vm1418, %v2752, %v971
      %v2785 = vsel %vm1418, %v2753, %v971
      %v2786 = vsel %vm1418, %v2754, %v2144
      %v2787 = vsel %vm1418, %v2755, %v2146
      %v2788 = vsel %vm1418, %v2756, %v2148
      %v2789 = vsel %vm1418, %v2757, %v2150
      %v2790 = vsel %vm1418, %v2758, %v2152
      %v2791 = vsel %vm1418, %v2759, %v2154
      %v2792 = vsel %vm1418, %v2760, %v2156
      %v2793 = vsel %vm1418, %v2761, %v2158
      %v2794 = vsel %vm1418, %v2762, %v2160
      %v2795 = vsel %vm1418, %v2763, %v2162
      %v2796 = vsel %vm1418, %v2764, %v2164
      %v2797 = vsel %vm1418, %v2765, %v2166
      %v2798 = vsel %vm1418, %v2766, %v2168
      %v2799 = vsel %vm1418, %v2767, %v2170
      %v2800 = vsel %vm1418, %v2768, %v2172
      %v2801 = vsel %vm1418, %v2769, %v2174
      %v2802 = vsel %vm1418, %v2770, %v2176
      %v2803 = vsel %vm1418, %v2771, %v2178
      %v2804 = vsel %vm1418, %v2772, %v2180
      %v2805 = vsel %vm1418, %v2773, %v2182
      %v2806 = vsel %vm1418, %v2774, %v2184
      %v2807 = vsel %vm1418, %v2775, %v2186
      %v2808 = vsel %vm1418, %v2776, %v2188
      %v2809 = vsel %vm1418, %v2777, %v2190
      %v2810 = vsel %vm1418, %v2778, %v2192
      %v2811 = vsel %vm1418, %v2779, %v2194
      %v2812 = vsel %vm1418, %v2780, %v2196
      %v2813 = vsel %vm1418, %v2781, %v2198
      %v2814 = vsel %vm1418, %v2782, %v2200
      %v2815 = vsel %vm1418, %v2783, %v2202
      %v2816 = vsel %vm1484, %v2784, %v2234
      %v2817 = vsel %vm1484, %v2785, %v2236
      %v2818 = vsel %vm1484, %v2786, %v2238
      %v2819 = vsel %vm1484, %v2787, %v2240
      %v2820 = vsel %vm1484, %v2788, %v2242
      %v2821 = vsel %vm1484, %v2789, %v2244
      %v2822 = vsel %vm1484, %v2790, %v2246
      %v2823 = vsel %vm1484, %v2791, %v2248
      %v2824 = vsel %vm1484, %v2792, %v2250
      %v2825 = vsel %vm1484, %v2793, %v2252
      %v2826 = vsel %vm1484, %v2794, %v2254
      %v2827 = vsel %vm1484, %v2795, %v2256
      %v2828 = vsel %vm1484, %v2796, %v2258
      %v2829 = vsel %vm1484, %v2797, %v2260
      %v2830 = vsel %vm1484, %v2798, %v2262
      %v2831 = vsel %vm1484, %v2799, %v2264
      %v2832 = vsel %vm1484, %v2800, %v2266
      %v2833 = vsel %vm1484, %v2801, %v2268
      %v2834 = vsel %vm1484, %v2802, %v2270
      %v2835 = vsel %vm1484, %v2803, %v2272
      %v2836 = vsel %vm1484, %v2804, %v2274
      %v2837 = vsel %vm1484, %v2805, %v2276
      %v2838 = vsel %vm1484, %v2806, %v2278
      %v2839 = vsel %vm1484, %v2807, %v2280
      %v2840 = vsel %vm1484, %v2808, %v2282
      %v2841 = vsel %vm1484, %v2809, %v2284
      %v2842 = vsel %vm1484, %v2810, %v2286
      %v2843 = vsel %vm1484, %v2811, %v2288
      %v2844 = vsel %vm1484, %v2812, %v2290
      %v2845 = vsel %vm1484, %v2813, %v2292
      %v2846 = vsel %vm1484, %v2814, %v2294
      %v2847 = vsel %vm1484, %v2815, %v2296
      %vm2848 = vcmask 326656
      %v2849 = vsel %vm2848, %v2816, %v2330
      %v2850 = vsel %vm2848, %v2817, %v2332
      %v2851 = vsel %vm2848, %v2818, %v2334
      %v2852 = vsel %vm2848, %v2819, %v2336
      %v2853 = vsel %vm2848, %v2820, %v2338
      %v2854 = vsel %vm2848, %v2821, %v2340
      %v2855 = vsel %vm2848, %v2822, %v2342
      %v2856 = vsel %vm2848, %v2823, %v2344
      %v2857 = vsel %vm2848, %v2824, %v2346
      %v2858 = vsel %vm2848, %v2825, %v2348
      %v2859 = vsel %vm2848, %v2826, %v2350
      %v2860 = vsel %vm2848, %v2827, %v2352
      %v2861 = vsel %vm2848, %v2828, %v2354
      %v2862 = vsel %vm2848, %v2829, %v2356
      %v2863 = vsel %vm2848, %v2830, %v2358
      %v2864 = vsel %vm2848, %v2831, %v2360
      %v2865 = vsel %vm2848, %v2832, %v2362
      %v2866 = vsel %vm2848, %v2833, %v2364
      %v2867 = vsel %vm2848, %v2834, %v2366
      %v2868 = vsel %vm2848, %v2835, %v2368
      %v2869 = vsel %vm2848, %v2836, %v2370
      %v2870 = vsel %vm2848, %v2837, %v2372
      %v2871 = vsel %vm2848, %v2838, %v2374
      %v2872 = vsel %vm2848, %v2839, %v2376
      %v2873 = vsel %vm2848, %v2840, %v2378
      %v2874 = vsel %vm2848, %v2841, %v2380
      %v2875 = vsel %vm2848, %v2842, %v2382
      %v2876 = vsel %vm2848, %v2843, %v2384
      %v2877 = vsel %vm2848, %v2844, %v2386
      %v2878 = vsel %vm2848, %v2845, %v2388
      %v2879 = vsel %vm2848, %v2846, %v2390
      %v2880 = vsel %vm2848, %v2847, %v2390
      %vm2881 = vcmask 392192
      %v2882 = vsel %vm2881, %v2849, %v2438
      %v2883 = vsel %vm2881, %v2850, %v2438
      %v2884 = vsel %vm2881, %v2851, %v2440
      %v2885 = vsel %vm2881, %v2852, %v2442
      %v2886 = vsel %vm2881, %v2853, %v2444
      %v2887 = vsel %vm2881, %v2854, %v2446
      %v2888 = vsel %vm2881, %v2855, %v2448
      %v2889 = vsel %vm2881, %v2856, %v2450
      %v2890 = vsel %vm2881, %v2857, %v2452
      %v2891 = vsel %vm2881, %v2858, %v2454
      %v2892 = vsel %vm2881, %v2859, %v2456
      %v2893 = vsel %vm2881, %v2860, %v2458
      %v2894 = vsel %vm2881, %v2861, %v2460
      %v2895 = vsel %vm2881, %v2862, %v2462
      %v2896 = vsel %vm2881, %v2863, %v2464
      %v2897 = vsel %vm2881, %v2864, %v2466
      %v2898 = vsel %vm2881, %v2865, %v2468
      %v2899 = vsel %vm2881, %v2866, %v2470
      %v2900 = vsel %vm2881, %v2867, %v2472
      %v2901 = vsel %vm2881, %v2868, %v2474
      %v2902 = vsel %vm2881, %v2869, %v2476
      %v2903 = vsel %vm2881, %v2870, %v2478
      %v2904 = vsel %vm2881, %v2871, %v2480
      %v2905 = vsel %vm2881, %v2872, %v2482
      %v2906 = vsel %vm2881, %v2873, %v2484
      %v2907 = vsel %vm2881, %v2874, %v2486
      %v2908 = vsel %vm2881, %v2875, %v2488
      %v2909 = vsel %vm2881, %v2876, %v2490
      %v2910 = vsel %vm2881, %v2877, %v2492
      %v2911 = vsel %vm2881, %v2878, %v2494
      %v2912 = vsel %vm2881, %v2879, %v2496
      %v2913 = vsel %vm2881, %v2880, %v2498
      %vm2914 = vcmask 457728
      %v2915 = vsel %vm2914, %v2882, %v2532
      %v2916 = vsel %vm2914, %v2883, %v2534
      %v2917 = vsel %vm2914, %v2884, %v2536
      %v2918 = vsel %vm2914, %v2885, %v2538
      %v2919 = vsel %vm2914, %v2886, %v2540
      %v2920 = vsel %vm2914, %v2887, %v2542
      %v2921 = vsel %vm2914, %v2888, %v2544
      %v2922 = vsel %vm2914, %v2889, %v2546
      %v2923 = vsel %vm2914, %v2890, %v2548
      %v2924 = vsel %vm2914, %v2891, %v2550
      %v2925 = vsel %vm2914, %v2892, %v2552
      %v2926 = vsel %vm2914, %v2893, %v2554
      %v2927 = vsel %vm2914, %v2894, %v2556
      %v2928 = vsel %vm2914, %v2895, %v2558
      %v2929 = vsel %vm2914, %v2896, %v2560
      %v2930 = vsel %vm2914, %v2897, %v2562
      %v2931 = vsel %vm2914, %v2898, %v2564
      %v2932 = vsel %vm2914, %v2899, %v2566
      %v2933 = vsel %vm2914, %v2900, %v2568
      %v2934 = vsel %vm2914, %v2901, %v2570
      %v2935 = vsel %vm2914, %v2902, %v2572
      %v2936 = vsel %vm2914, %v2903, %v2574
      %v2937 = vsel %vm2914, %v2904, %v2576
      %v2938 = vsel %vm2914, %v2905, %v2578
      %v2939 = vsel %vm2914, %v2906, %v2580
      %v2940 = vsel %vm2914, %v2907, %v2582
      %v2941 = vsel %vm2914, %v2908, %v2584
      %v2942 = vsel %vm2914, %v2909, %v2586
      %v2943 = vsel %vm2914, %v2910, %v2588
      %v2944 = vsel %vm2914, %v2911, %v2590
      %v2945 = vsel %vm2914, %v2912, %v2592
      %v2946 = vsel %vm2914, %v2913, %v2594
      %vm2947 = vcmask 523264
      %v2948 = vsel %vm2947, %v2915, %v2628
      %v2949 = vsel %vm2947, %v2916, %v2630
      %v2950 = vsel %vm2947, %v2917, %v2632
      %v2951 = vsel %vm2947, %v2918, %v2634
      %v2952 = vsel %vm2947, %v2919, %v2636
      %v2953 = vsel %vm2947, %v2920, %v2638
      %v2954 = vsel %vm2947, %v2921, %v2640
      %v2955 = vsel %vm2947, %v2922, %v2642
      %v2956 = vsel %vm2947, %v2923, %v2644
      %v2957 = vsel %vm2947, %v2924, %v2646
      %v2958 = vsel %vm2947, %v2925, %v2648
      %v2959 = vsel %vm2947, %v2926, %v2650
      %v2960 = vsel %vm2947, %v2927, %v2652
      %v2961 = vsel %vm2947, %v2928, %v2654
      %v2962 = vsel %vm2947, %v2929, %v2656
      %v2963 = vsel %vm2947, %v2930, %v2658
      %v2964 = vsel %vm2947, %v2931, %v2660
      %v2965 = vsel %vm2947, %v2932, %v2662
      %v2966 = vsel %vm2947, %v2933, %v2664
      %v2967 = vsel %vm2947, %v2934, %v2666
      %v2968 = vsel %vm2947, %v2935, %v2668
      %v2969 = vsel %vm2947, %v2936, %v2670
      %v2970 = vsel %vm2947, %v2937, %v2672
      %v2971 = vsel %vm2947, %v2938, %v2674
      %v2972 = vsel %vm2947, %v2939, %v2676
      %v2973 = vsel %vm2947, %v2940, %v2678
      %v2974 = vsel %vm2947, %v2941, %v2680
      %v2975 = vsel %vm2947, %v2942, %v2682
      %v2976 = vsel %vm2947, %v2943, %v2684
      %v2977 = vsel %vm2947, %v2944, %v2686
      %v2978 = vsel %vm2947, %v2945, %v2688
      %v2979 = vsel %vm2947, %v2946, %v2688
      %v2980 = vpack.c.bf16 %v2949, %v2948
      %v2981 = vpack.c.bf16 %v2951, %v2950
      %v2982 = vpack.c.bf16 %v2953, %v2952
      %v2983 = vpack.c.bf16 %v2955, %v2954
      %v2984 = vpack.c.bf16 %v2957, %v2956
      %v2985 = vpack.c.bf16 %v2959, %v2958
      %v2986 = vpack.c.bf16 %v2961, %v2960
      %v2987 = vpack.c.bf16 %v2963, %v2962
      %v2988 = vpack.c.bf16 %v2965, %v2964
      %v2989 = vpack.c.bf16 %v2967, %v2966
      %v2990 = vpack.c.bf16 %v2969, %v2968
      %v2991 = vpack.c.bf16 %v2971, %v2970
      %v2992 = vpack.c.bf16 %v2973, %v2972
      %v2993 = vpack.c.bf16 %v2975, %v2974
      %v2994 = vpack.c.bf16 %v2977, %v2976
      %v2995 = vpack.c.bf16 %v2979, %v2978
      %v2996 = vld [vmem:[%s3] sm:$0xf]
      %v2997 = vld [vmem:[%s3 + $0x4] sm:$0xf]
      %v2998 = vld [vmem:[%s3 + $0x8] sm:$0xf]
      %v2999 = vld [vmem:[%s3 + $0xc] sm:$0xf]
      %v3000 = vld [vmem:[%s3 + $0x10] sm:$0xf]
      %v3001 = vld [vmem:[%s3 + $0x14] sm:$0xf]
      %v3002 = vld [vmem:[%s3 + $0x18] sm:$0xf]
      %v3003 = vld [vmem:[%s3 + $0x1c] sm:$0xf]
      %v3004 = vld [vmem:[%s3 + $0x20] sm:$0xf]
      %v3005 = vld [vmem:[%s4] sm:$0x1]
      %v3007 = vperm.slane %v3005, 0
      %v3018 = vunpack.c.l.b16 %v2996
      %v3019 = vunpack.c.l.b16 %v2997
      %v3020 = vunpack.c.l.b16 %v2998
      %v3021 = vunpack.c.l.b16 %v2999
      %v3022 = vunpack.c.l.b16 %v3000
      %v3023 = vunpack.c.l.b16 %v3001
      %v3024 = vunpack.c.l.b16 %v3002
      %v3025 = vunpack.c.l.b16 %v3003
      %v3026 = vunpack.c.l.b16 %v3004
      %v3027 = vpack.c.b16 %v3019, %v3018
      %v3028 = vpack.c.b16 %v3021, %v3020
      %v3029 = vpack.c.b16 %v3023, %v3022
      %v3030 = vpack.c.b16 %v3025, %v3024
      %v3031 = vpack.c.b16 %v3026, %v3026
      %vm3036 = vcmask 588800
      %v3038 = vsel %vm3036, %v2980, 0
      %v3041 = vsel %vm3036, %v2981, 0
      %v3044 = vsel %vm3036, %v2982, 0
      %v3047 = vsel %vm3036, %v2983, 0
      %v3050 = vsel %vm3036, %v2984, 0
      %v3053 = vsel %vm3036, %v2985, 0
      %v3056 = vsel %vm3036, %v2986, 0
      %v3059 = vsel %vm3036, %v2987, 0
      %v3062 = vsel %vm3036, %v2988, 0
      %v3065 = vsel %vm3036, %v2989, 0
      %v3068 = vsel %vm3036, %v2990, 0
      %v3071 = vsel %vm3036, %v2991, 0
      %v3074 = vsel %vm3036, %v2992, 0
      %v3077 = vsel %vm3036, %v2993, 0
      %v3080 = vsel %vm3036, %v2994, 0
      %v3083 = vsel %vm3036, %v2995, 0
      %vm3085 = vcmask 1043456
      %v3087 = vsel %vm3085, %v3031, 0
      %3089 = vmatpush.bf16.msra.mxu0 0
      %3090 = vmatpush.bf16.msra.mxu0 0
      %3091 = vmatpush.bf16.msra.mxu0 0
      %3092 = vmatpush.bf16.msra.mxu0 %v3087
      %3093 = vmatpush.bf16.msra.mxu0 %v3030
      %3094 = vmatpush.bf16.msra.mxu0 %v3029
      %3095 = vmatpush.bf16.msra.mxu0 %v3028
      %3096 = vmatpush.bf16.msra.mxu0 %v3027
      %3097 = vmatmul.bf16.gmra.mxu0 %v3038
      %v3098 = vpop.f32.mrf.mxu0
      %v3099 = vadd.f32 %v3007, %v3098
      %v3100 = vpop.f32.mrf.mxu0
      %v3101 = vadd.f32 %v3007, %v3100
      %3102 = vmatmul.bf16.gmra.mxu0 %v3041
      %v3103 = vpop.f32.mrf.mxu0
      %v3104 = vadd.f32 %v3007, %v3103
      %v3105 = vpop.f32.mrf.mxu0
      %v3106 = vadd.f32 %v3007, %v3105
      %3107 = vmatmul.bf16.gmra.mxu0 %v3044
      %v3108 = vpop.f32.mrf.mxu0
      %v3109 = vadd.f32 %v3007, %v3108
      %v3110 = vpop.f32.mrf.mxu0
      %v3111 = vadd.f32 %v3007, %v3110
      %3112 = vmatmul.bf16.gmra.mxu0 %v3047
      %v3113 = vpop.f32.mrf.mxu0
      %v3114 = vadd.f32 %v3007, %v3113
      %v3115 = vpop.f32.mrf.mxu0
      %v3116 = vadd.f32 %v3007, %v3115
      %3117 = vmatmul.bf16.gmra.mxu0 %v3050
      %v3118 = vpop.f32.mrf.mxu0
      %v3119 = vadd.f32 %v3007, %v3118
      %v3120 = vpop.f32.mrf.mxu0
      %v3121 = vadd.f32 %v3007, %v3120
      %3122 = vmatmul.bf16.gmra.mxu0 %v3053
      %v3123 = vpop.f32.mrf.mxu0
      %v3124 = vadd.f32 %v3007, %v3123
      %v3125 = vpop.f32.mrf.mxu0
      %v3126 = vadd.f32 %v3007, %v3125
      %3127 = vmatmul.bf16.gmra.mxu0 %v3056
      %v3128 = vpop.f32.mrf.mxu0
      %v3129 = vadd.f32 %v3007, %v3128
      %v3130 = vpop.f32.mrf.mxu0
      %v3131 = vadd.f32 %v3007, %v3130
      %3132 = vmatmul.bf16.gmra.mxu0 %v3059
      %v3133 = vpop.f32.mrf.mxu0
      %v3134 = vadd.f32 %v3007, %v3133
      %v3135 = vpop.f32.mrf.mxu0
      %v3136 = vadd.f32 %v3007, %v3135
      %3137 = vmatmul.bf16.gmra.mxu0 %v3062
      %v3138 = vpop.f32.mrf.mxu0
      %v3139 = vadd.f32 %v3007, %v3138
      %v3140 = vpop.f32.mrf.mxu0
      %v3141 = vadd.f32 %v3007, %v3140
      %3142 = vmatmul.bf16.gmra.mxu0 %v3065
      %v3143 = vpop.f32.mrf.mxu0
      %v3144 = vadd.f32 %v3007, %v3143
      %v3145 = vpop.f32.mrf.mxu0
      %v3146 = vadd.f32 %v3007, %v3145
      %3147 = vmatmul.bf16.gmra.mxu0 %v3068
      %v3148 = vpop.f32.mrf.mxu0
      %v3149 = vadd.f32 %v3007, %v3148
      %v3150 = vpop.f32.mrf.mxu0
      %v3151 = vadd.f32 %v3007, %v3150
      %3152 = vmatmul.bf16.gmra.mxu0 %v3071
      %v3153 = vpop.f32.mrf.mxu0
      %v3154 = vadd.f32 %v3007, %v3153
      %v3155 = vpop.f32.mrf.mxu0
      %v3156 = vadd.f32 %v3007, %v3155
      %3157 = vmatmul.bf16.gmra.mxu0 %v3074
      %v3158 = vpop.f32.mrf.mxu0
      %v3159 = vadd.f32 %v3007, %v3158
      %v3160 = vpop.f32.mrf.mxu0
      %v3161 = vadd.f32 %v3007, %v3160
      %3162 = vmatmul.bf16.gmra.mxu0 %v3077
      %v3163 = vpop.f32.mrf.mxu0
      %v3164 = vadd.f32 %v3007, %v3163
      %v3165 = vpop.f32.mrf.mxu0
      %v3166 = vadd.f32 %v3007, %v3165
      %3167 = vmatmul.bf16.gmra.mxu0 %v3080
      %v3168 = vpop.f32.mrf.mxu0
      %v3169 = vadd.f32 %v3007, %v3168
      %v3170 = vpop.f32.mrf.mxu0
      %v3171 = vadd.f32 %v3007, %v3170
      %3172 = vmatmul.bf16.gmra.mxu0 %v3083
      %v3173 = vpop.f32.mrf.mxu0
      %v3174 = vadd.f32 %v3007, %v3173
      %v3175 = vpop.f32.mrf.mxu0
      %v3176 = vadd.f32 %v3007, %v3175
      %3177 = vdwg.mxu0
      %v3178 = vadd.f32 %v3099, %v226
      %v3179 = vadd.f32 %v3101, %v227
      %v3180 = vadd.f32 %v3104, %v228
      %v3181 = vadd.f32 %v3106, %v229
      %v3182 = vadd.f32 %v3109, %v230
      %v3183 = vadd.f32 %v3111, %v231
      %v3184 = vadd.f32 %v3114, %v232
      %v3185 = vadd.f32 %v3116, %v233
      %v3186 = vadd.f32 %v3119, %v234
      %v3187 = vadd.f32 %v3121, %v235
      %v3188 = vadd.f32 %v3124, %v236
      %v3189 = vadd.f32 %v3126, %v237
      %v3190 = vadd.f32 %v3129, %v238
      %v3191 = vadd.f32 %v3131, %v239
      %v3192 = vadd.f32 %v3134, %v240
      %v3193 = vadd.f32 %v3136, %v241
      %v3194 = vadd.f32 %v3139, %v242
      %v3195 = vadd.f32 %v3141, %v243
      %v3196 = vadd.f32 %v3144, %v244
      %v3197 = vadd.f32 %v3146, %v245
      %v3198 = vadd.f32 %v3149, %v246
      %v3199 = vadd.f32 %v3151, %v247
      %v3200 = vadd.f32 %v3154, %v248
      %v3201 = vadd.f32 %v3156, %v249
      %v3202 = vadd.f32 %v3159, %v250
      %v3203 = vadd.f32 %v3161, %v251
      %v3204 = vadd.f32 %v3164, %v252
      %v3205 = vadd.f32 %v3166, %v253
      %v3206 = vadd.f32 %v3169, %v254
      %v3207 = vadd.f32 %v3171, %v255
      %v3208 = vadd.f32 %v3174, %v256
      %v3209 = vadd.f32 %v3176, %v257
      %v3210 = vmax.f32 %v3178, 0.0
      %v3211 = vmax.f32 %v3179, 0.0
      %v3212 = vmax.f32 %v3180, 0.0
      %v3213 = vmax.f32 %v3181, 0.0
      %v3214 = vmax.f32 %v3182, 0.0
      %v3215 = vmax.f32 %v3183, 0.0
      %v3216 = vmax.f32 %v3184, 0.0
      %v3217 = vmax.f32 %v3185, 0.0
      %v3218 = vmax.f32 %v3186, 0.0
      %v3219 = vmax.f32 %v3187, 0.0
      %v3220 = vmax.f32 %v3188, 0.0
      %v3221 = vmax.f32 %v3189, 0.0
      %v3222 = vmax.f32 %v3190, 0.0
      %v3223 = vmax.f32 %v3191, 0.0
      %v3224 = vmax.f32 %v3192, 0.0
      %v3225 = vmax.f32 %v3193, 0.0
      %v3226 = vmax.f32 %v3194, 0.0
      %v3227 = vmax.f32 %v3195, 0.0
      %v3228 = vmax.f32 %v3196, 0.0
      %v3229 = vmax.f32 %v3197, 0.0
      %v3230 = vmax.f32 %v3198, 0.0
      %v3231 = vmax.f32 %v3199, 0.0
      %v3232 = vmax.f32 %v3200, 0.0
      %v3233 = vmax.f32 %v3201, 0.0
      %v3234 = vmax.f32 %v3202, 0.0
      %v3235 = vmax.f32 %v3203, 0.0
      %v3236 = vmax.f32 %v3204, 0.0
      %v3237 = vmax.f32 %v3205, 0.0
      %v3238 = vmax.f32 %v3206, 0.0
      %v3239 = vmax.f32 %v3207, 0.0
      %v3240 = vmax.f32 %v3208, 0.0
      %v3241 = vmax.f32 %v3209, 0.0
      %3242 = vst.msk [vmem:[%s224] sm:$0xff] %vm1253, %v3210
      %3243 = vst.msk [vmem:[%s224 + $0x8] sm:$0xff] %vm1253, %v3211
      %3244 = vst.msk [vmem:[%s224 + $0x10] sm:$0xff] %vm1253, %v3212
      %3245 = vst.msk [vmem:[%s224 + $0x18] sm:$0xff] %vm1253, %v3213
      %3246 = vst.msk [vmem:[%s224 + $0x20] sm:$0xff] %vm1253, %v3214
      %3247 = vst.msk [vmem:[%s224 + $0x28] sm:$0xff] %vm1253, %v3215
      %3248 = vst.msk [vmem:[%s224 + $0x30] sm:$0xff] %vm1253, %v3216
      %3249 = vst.msk [vmem:[%s224 + $0x38] sm:$0xff] %vm1253, %v3217
      %3250 = vst.msk [vmem:[%s224 + $0x40] sm:$0xff] %vm1253, %v3218
      %3251 = vst.msk [vmem:[%s224 + $0x48] sm:$0xff] %vm1253, %v3219
      %3252 = vst.msk [vmem:[%s224 + $0x50] sm:$0xff] %vm1253, %v3220
      %3253 = vst.msk [vmem:[%s224 + $0x58] sm:$0xff] %vm1253, %v3221
      %3254 = vst.msk [vmem:[%s224 + $0x60] sm:$0xff] %vm1253, %v3222
      %3255 = vst.msk [vmem:[%s224 + $0x68] sm:$0xff] %vm1253, %v3223
      %3256 = vst.msk [vmem:[%s224 + $0x70] sm:$0xff] %vm1253, %v3224
      %3257 = vst.msk [vmem:[%s224 + $0x78] sm:$0xff] %vm1253, %v3225
      %3258 = vst.msk [vmem:[%s224 + $0x80] sm:$0xff] %vm1253, %v3226
      %3259 = vst.msk [vmem:[%s224 + $0x88] sm:$0xff] %vm1253, %v3227
      %3260 = vst.msk [vmem:[%s224 + $0x90] sm:$0xff] %vm1253, %v3228
      %3261 = vst.msk [vmem:[%s224 + $0x98] sm:$0xff] %vm1253, %v3229
      %3262 = vst.msk [vmem:[%s224 + $0xa0] sm:$0xff] %vm1253, %v3230
      %3263 = vst.msk [vmem:[%s224 + $0xa8] sm:$0xff] %vm1253, %v3231
      %3264 = vst.msk [vmem:[%s224 + $0xb0] sm:$0xff] %vm1253, %v3232
      %3265 = vst.msk [vmem:[%s224 + $0xb8] sm:$0xff] %vm1253, %v3233
      %3266 = vst.msk [vmem:[%s224 + $0xc0] sm:$0xff] %vm1253, %v3234
      %3267 = vst.msk [vmem:[%s224 + $0xc8] sm:$0xff] %vm1253, %v3235
      %3268 = vst.msk [vmem:[%s224 + $0xd0] sm:$0xff] %vm1253, %v3236
      %3269 = vst.msk [vmem:[%s224 + $0xd8] sm:$0xff] %vm1253, %v3237
      %3270 = vst.msk [vmem:[%s224 + $0xe0] sm:$0xff] %vm1253, %v3238
      %3271 = vst.msk [vmem:[%s224 + $0xe8] sm:$0xff] %vm1253, %v3239
      %3272 = vst.msk [vmem:[%s224 + $0xf0] sm:$0xff] %vm1253, %v3240
      %3273 = vst.msk [vmem:[%s224 + $0xf8] sm:$0xff] %vm1253, %v3241
      %p3274 = scmp.lt.s32.totalorder %s16, 1
      %s3275 = scalar_select %p3274, %s16, 1
      %s3276 = smul.addr %s3275, 32
      %s3277 = smul.addr %s3276, 8
      %s3278 = scalar_lea.vmem %s5, %s3277
      // Predicated region
      $region41: #{tpu_custom_call.1} parent=39 // pred_check
        %p3279 = pneg %p144
      $region42: #{tpu_custom_call.1} parent=39 // pred_check_branch
        %3281 = sbr.rel (%p3279) target = $region44
      $region43: #{tpu_custom_call.1} parent=39 // pred_region
        _
      $region44: #{tpu_custom_call.1} parent=39 // pred_fallthru
        _
    $region40: #{tpu_custom_call.1} parent=5 // pred_fallthru
      _
    %p3282 = scmp.le.s32.totalorder 2, %s11
    // Predicated region
    $region45: #{tpu_custom_call.1} parent=5 // pred_check
      %p3283 = pneg %p3282
    $region46: #{tpu_custom_call.1} parent=5 // pred_check_branch
      %3285 = sbr.rel (%p3283) target = $region48
    $region47: #{tpu_custom_call.1} parent=5 // pred_region
      %s3286 = ssub.s32 %s11, 2
      // Predicated region
      $region49: #{tpu_custom_call.1} parent=47 // pred_check
        %p3287 = pneg %p150
      $region50: #{tpu_custom_call.1} parent=47 // pred_check_branch
        %3289 = sbr.rel (%p3287) target = $region52
      $region51: #{tpu_custom_call.1} parent=47 // pred_region
        %p3290 = scmp.lt.s32.totalorder %s17, 1
        %s3291 = scalar_select %p3290, %s17, 1
        %s3292 = smul.addr %s3291, 32
        %s3293 = smul.addr %s3292, 8
        %s3294 = scalar_lea.vmem %s5, %s3293
      $region52: #{tpu_custom_call.1} parent=47 // pred_fallthru
        _
    $region48: #{tpu_custom_call.1} parent=5 // pred_fallthru
      _
  $region6: #{tpu_custom_call.1} parent=0 // loop_footer
    %s15 = sadd.s32 1, %s11
  $region7: #{tpu_custom_call.1} parent=0 // loop_footer_branch
    %10 = sbr.rel target = $region3
  $region8: #{tpu_custom_call.1} parent=0 // loop_exit
    _

</llo_original>
